<compile_context>
chip_gen: v6e
topology: v6e:2x2x1
jax: 0.10.0
libtpu: 0.0.40
codegen_flags: <defaults>
</compile_context>

<pallas_src>
import jax
import jax.numpy as jnp
from jax.experimental import pallas as pl
from jax.experimental.pallas import tpu as pltpu


def _make_clip_embeddings_kernel(rows_per_step: int, seq_len: int):
    RB, S = rows_per_step, seq_len

    def kernel(ids_ref, tok_emb_hbm, pos_emb_ref, out_ref, gather_buf, sems):
        rb_base = pl.program_id(0) * RB

        # Issue every row-gather DMA for this step before waiting on any of them: RB and S are
        # static, so this fully unrolls into independent DMAs the engines can overlap.
        copies = []
        for r in range(RB):
            for s in range(S):
                tok_id = ids_ref[rb_base + r, s]               # scalar read from SMEM
                cp = pltpu.make_async_copy(
                    tok_emb_hbm.at[pl.ds(tok_id, 1), :],       # (1, D) row in HBM
                    gather_buf.at[r, pl.ds(s, 1), :],          # (1, D) slot in VMEM scratch
                    sems.at[r, s],
                )
                cp.start()
                copies.append(cp)
        for cp in copies:
            cp.wait()

        # Add the resident position embedding (broadcast over the RB rows) and store one
        # lane/sublane-aligned (RB, S, D) slab.
        out_ref[...] = (gather_buf[...] + pos_emb_ref[...][None]).astype(out_ref.dtype)

    return kernel


def clip_embeddings(x, tok_emb, pos_emb, *, max_rows_per_step=4):
    """x: (B, S) int32 token ids; tok_emb: (V, D); pos_emb: (S, D) -> (B, S, D)."""
    B, S = x.shape
    V, D = tok_emb.shape
    assert pos_emb.shape == (S, D)

    # Largest divisor of B (capped) -> rows handled per grid step. Keeps the gather scratch small
    # while amortizing per-step overhead; exact divisor avoids any partial-block / OOB handling.
    RB = 1
    for cand in range(min(B, max_rows_per_step), 0, -1):
        if B % cand == 0:
            RB = cand
            break

    kernel = _make_clip_embeddings_kernel(RB, S)

    return pl.pallas_call(
        kernel,
        out_shape=jax.ShapeDtypeStruct((B, S, D), tok_emb.dtype),
        grid_spec=pltpu.PrefetchScalarGridSpec(
            num_scalar_prefetch=1,                              # token ids -> SMEM
            grid=(B // RB,),
            in_specs=[
                pl.BlockSpec(memory_space=pl.ANY),              # embedding table stays in HBM
                pl.BlockSpec((S, D), lambda i, ids: (0, 0)),    # position embedding, resident
            ],
            out_specs=pl.BlockSpec((RB, S, D), lambda i, ids: (i, 0, 0)),
            scratch_shapes=[
                pltpu.VMEM((RB, S, D), tok_emb.dtype),          # gathered token rows
                pltpu.SemaphoreType.DMA((RB, S)),               # one DMA semaphore per row copy
            ],
        ),
        compiler_params=pltpu.CompilerParams(
            dimension_semantics=("parallel",),                  # stateless steps; v7x megacore
        ),
    )(x.astype(jnp.int32), tok_emb, pos_emb)


if __name__ == "__main__":
    # Small shapes consistent with the module. D=128 keeps the output store lane-dense,
    # S=8 keeps tiles sublane-aligned.
    vocab_size, n_embed, seq_len, batch = 64, 128, 8, 2

    key = jax.random.PRNGKey(0)
    k_tok, k_pos, k_ids = jax.random.split(key, 3)

    # nn.Embedding default init ~ N(0,1); position_embedding is zeros in the PyTorch module,
    # initialized non-zero here (deterministically) so the add path is actually exercised.
    tok_emb = jax.random.normal(k_tok, (vocab_size, n_embed), dtype=jnp.float32)
    pos_emb = 0.01 * jax.random.normal(k_pos, (seq_len, n_embed), dtype=jnp.float32)
    x = jax.random.randint(k_ids, (batch, seq_len), 0, vocab_size, dtype=jnp.int32)

    out = clip_embeddings(x, tok_emb, pos_emb)
    out = jax.block_until_ready(out)

    # Pure-JAX reference: token_embedding(x) + position_embedding (broadcast over batch).
    ref = tok_emb[x] + pos_emb[None]
    assert out.shape == (batch, seq_len, n_embed)
    assert jnp.allclose(out, ref, atol=1e-6, rtol=1e-6), "mismatch vs reference"

    print("KERNEL_OK")
</pallas_src>

<mosaic_0001>
module attributes {stable_mosaic.version = 11 : i64} {
  func.func @kernel(%arg0: i32, %arg1: memref<2x8xi32, #tpu.memory_space<smem>>, %arg2: memref<64x128xf32, #tpu.memory_space<any>>, %arg3: memref<8x128xf32, #tpu.memory_space<vmem>>, %arg4: memref<2x8x128xf32, #tpu.memory_space<vmem>>, %arg5: memref<2x8x128xf32, #tpu.memory_space<vmem>>, %arg6: memref<2x8x!tpu.dma_semaphore, #tpu.memory_space<semaphore_mem>>) attributes {dimension_semantics = [#tpu.dimension_semantics<parallel>], iteration_bounds = array<i64: 1>, scalar_prefetch = 1 : i64, scratch_operands = 2 : i64, tpu.core_type = #tpu.core_type<tc>, window_params = [{}, {pipeline_mode = #tpu.pipeline_mode<synchronous>, transform_indices = @transform_1, window_bounds = array<i64: 8, 128>}, {transform_indices = @transform_2, window_bounds = array<i64: 2, 8, 128>}]} {
    %c2_i32 = arith.constant 2 : i32
    %0 = arith.muli %arg0, %c2_i32 : i32
    %c0_i32 = arith.constant 0 : i32
    %1 = arith.addi %0, %c0_i32 : i32
    %2 = arith.index_cast %1 : i32 to index
    %c0 = arith.constant 0 : index
    %3 = memref.load %arg1[%2, %c0] : memref<2x8xi32, #tpu.memory_space<smem>>
    %c0_i32_0 = arith.constant 0 : i32
    %c0_i32_1 = arith.constant 0 : i32
    %c0_i32_2 = arith.constant 0 : i32
    %c0_i32_3 = arith.constant 0 : i32
    %4 = tpu.memref_slice %arg2[%3, %c0_i32_3] : memref<64x128xf32, #tpu.memory_space<any>> -> memref<1x128xf32, #tpu.memory_space<any>>
    %c0_i32_4 = arith.constant 0 : i32
    %c0_i32_5 = arith.constant 0 : i32
    %5 = tpu.memref_slice %arg5[%c0_i32_0, %c0_i32_4, %c0_i32_5] : memref<2x8x128xf32, #tpu.memory_space<vmem>> -> memref<1x1x128xf32, #tpu.memory_space<vmem>>
    %6 = tpu.memref_squeeze %5 : memref<1x1x128xf32, #tpu.memory_space<vmem>> -> memref<1x128xf32, #tpu.memory_space<vmem>>
    %7 = tpu.memref_slice %arg6[%c0_i32_1, %c0_i32_2] : memref<2x8x!tpu.dma_semaphore, #tpu.memory_space<semaphore_mem>> -> memref<1x1x!tpu.dma_semaphore, #tpu.memory_space<semaphore_mem>>
    %8 = tpu.memref_squeeze %7 : memref<1x1x!tpu.dma_semaphore, #tpu.memory_space<semaphore_mem>> -> memref<!tpu.dma_semaphore, #tpu.memory_space<semaphore_mem>>
    tpu.enqueue_dma source(%4 : memref<1x128xf32, #tpu.memory_space<any>>) target(%6 : memref<1x128xf32, #tpu.memory_space<vmem>>) target_semaphore(%8 : memref<!tpu.dma_semaphore, #tpu.memory_space<semaphore_mem>>)
    %c0_i32_6 = arith.constant 0 : i32
    %9 = arith.addi %0, %c0_i32_6 : i32
    %10 = arith.index_cast %9 : i32 to index
    %c1 = arith.constant 1 : index
    %11 = memref.load %arg1[%10, %c1] : memref<2x8xi32, #tpu.memory_space<smem>>
    %c0_i32_7 = arith.constant 0 : i32
    %c0_i32_8 = arith.constant 0 : i32
    %c1_i32 = arith.constant 1 : i32
    %c0_i32_9 = arith.constant 0 : i32
    %12 = tpu.memref_slice %arg2[%11, %c0_i32_9] : memref<64x128xf32, #tpu.memory_space<any>> -> memref<1x128xf32, #tpu.memory_space<any>>
    %c1_i32_10 = arith.constant 1 : i32
    %c0_i32_11 = arith.constant 0 : i32
    %13 = tpu.memref_slice %arg5[%c0_i32_7, %c1_i32_10, %c0_i32_11] : memref<2x8x128xf32, #tpu.memory_space<vmem>> -> memref<1x1x128xf32, #tpu.memory_space<vmem>>
    %14 = tpu.memref_squeeze %13 : memref<1x1x128xf32, #tpu.memory_space<vmem>> -> memref<1x128xf32, #tpu.memory_space<vmem>>
    %15 = tpu.memref_slice %arg6[%c0_i32_8, %c1_i32] : memref<2x8x!tpu.dma_semaphore, #tpu.memory_space<semaphore_mem>> -> memref<1x1x!tpu.dma_semaphore, #tpu.memory_space<semaphore_mem>>
    %16 = tpu.memref_squeeze %15 : memref<1x1x!tpu.dma_semaphore, #tpu.memory_space<semaphore_mem>> -> memref<!tpu.dma_semaphore, #tpu.memory_space<semaphore_mem>>
    tpu.enqueue_dma source(%12 : memref<1x128xf32, #tpu.memory_space<any>>) target(%14 : memref<1x128xf32, #tpu.memory_space<vmem>>) target_semaphore(%16 : memref<!tpu.dma_semaphore, #tpu.memory_space<semaphore_mem>>)
    %c0_i32_12 = arith.constant 0 : i32
    %17 = arith.addi %0, %c0_i32_12 : i32
    %18 = arith.index_cast %17 : i32 to index
    %c2 = arith.constant 2 : index
    %19 = memref.load %arg1[%18, %c2] : memref<2x8xi32, #tpu.memory_space<smem>>
    %c0_i32_13 = arith.constant 0 : i32
    %c0_i32_14 = arith.constant 0 : i32
    %c2_i32_15 = arith.constant 2 : i32
    %c0_i32_16 = arith.constant 0 : i32
    %20 = tpu.memref_slice %arg2[%19, %c0_i32_16] : memref<64x128xf32, #tpu.memory_space<any>> -> memref<1x128xf32, #tpu.memory_space<any>>
    %c2_i32_17 = arith.constant 2 : i32
    %c0_i32_18 = arith.constant 0 : i32
    %21 = tpu.memref_slice %arg5[%c0_i32_13, %c2_i32_17, %c0_i32_18] : memref<2x8x128xf32, #tpu.memory_space<vmem>> -> memref<1x1x128xf32, #tpu.memory_space<vmem>>
    %22 = tpu.memref_squeeze %21 : memref<1x1x128xf32, #tpu.memory_space<vmem>> -> memref<1x128xf32, #tpu.memory_space<vmem>>
    %23 = tpu.memref_slice %arg6[%c0_i32_14, %c2_i32_15] : memref<2x8x!tpu.dma_semaphore, #tpu.memory_space<semaphore_mem>> -> memref<1x1x!tpu.dma_semaphore, #tpu.memory_space<semaphore_mem>>
    %24 = tpu.memref_squeeze %23 : memref<1x1x!tpu.dma_semaphore, #tpu.memory_space<semaphore_mem>> -> memref<!tpu.dma_semaphore, #tpu.memory_space<semaphore_mem>>
    tpu.enqueue_dma source(%20 : memref<1x128xf32, #tpu.memory_space<any>>) target(%22 : memref<1x128xf32, #tpu.memory_space<vmem>>) target_semaphore(%24 : memref<!tpu.dma_semaphore, #tpu.memory_space<semaphore_mem>>)
    %c0_i32_19 = arith.constant 0 : i32
    %25 = arith.addi %0, %c0_i32_19 : i32
    %26 = arith.index_cast %25 : i32 to index
    %c3 = arith.constant 3 : index
    %27 = memref.load %arg1[%26, %c3] : memref<2x8xi32, #tpu.memory_space<smem>>
    %c0_i32_20 = arith.constant 0 : i32
    %c0_i32_21 = arith.constant 0 : i32
    %c3_i32 = arith.constant 3 : i32
    %c0_i32_22 = arith.constant 0 : i32
    %28 = tpu.memref_slice %arg2[%27, %c0_i32_22] : memref<64x128xf32, #tpu.memory_space<any>> -> memref<1x128xf32, #tpu.memory_space<any>>
    %c3_i32_23 = arith.constant 3 : i32
    %c0_i32_24 = arith.constant 0 : i32
    %29 = tpu.memref_slice %arg5[%c0_i32_20, %c3_i32_23, %c0_i32_24] : memref<2x8x128xf32, #tpu.memory_space<vmem>> -> memref<1x1x128xf32, #tpu.memory_space<vmem>>
    %30 = tpu.memref_squeeze %29 : memref<1x1x128xf32, #tpu.memory_space<vmem>> -> memref<1x128xf32, #tpu.memory_space<vmem>>
    %31 = tpu.memref_slice %arg6[%c0_i32_21, %c3_i32] : memref<2x8x!tpu.dma_semaphore, #tpu.memory_space<semaphore_mem>> -> memref<1x1x!tpu.dma_semaphore, #tpu.memory_space<semaphore_mem>>
    %32 = tpu.memref_squeeze %31 : memref<1x1x!tpu.dma_semaphore, #tpu.memory_space<semaphore_mem>> -> memref<!tpu.dma_semaphore, #tpu.memory_space<semaphore_mem>>
    tpu.enqueue_dma source(%28 : memref<1x128xf32, #tpu.memory_space<any>>) target(%30 : memref<1x128xf32, #tpu.memory_space<vmem>>) target_semaphore(%32 : memref<!tpu.dma_semaphore, #tpu.memory_space<semaphore_mem>>)
    %c0_i32_25 = arith.constant 0 : i32
    %33 = arith.addi %0, %c0_i32_25 : i32
    %34 = arith.index_cast %33 : i32 to index
    %c4 = arith.constant 4 : index
    %35 = memref.load %arg1[%34, %c4] : memref<2x8xi32, #tpu.memory_space<smem>>
    %c0_i32_26 = arith.constant 0 : i32
    %c0_i32_27 = arith.constant 0 : i32
    %c4_i32 = arith.constant 4 : i32
    %c0_i32_28 = arith.constant 0 : i32
    %36 = tpu.memref_slice %arg2[%35, %c0_i32_28] : memref<64x128xf32, #tpu.memory_space<any>> -> memref<1x128xf32, #tpu.memory_space<any>>
    %c4_i32_29 = arith.constant 4 : i32
    %c0_i32_30 = arith.constant 0 : i32
    %37 = tpu.memref_slice %arg5[%c0_i32_26, %c4_i32_29, %c0_i32_30] : memref<2x8x128xf32, #tpu.memory_space<vmem>> -> memref<1x1x128xf32, #tpu.memory_space<vmem>>
    %38 = tpu.memref_squeeze %37 : memref<1x1x128xf32, #tpu.memory_space<vmem>> -> memref<1x128xf32, #tpu.memory_space<vmem>>
    %39 = tpu.memref_slice %arg6[%c0_i32_27, %c4_i32] : memref<2x8x!tpu.dma_semaphore, #tpu.memory_space<semaphore_mem>> -> memref<1x1x!tpu.dma_semaphore, #tpu.memory_space<semaphore_mem>>
    %40 = tpu.memref_squeeze %39 : memref<1x1x!tpu.dma_semaphore, #tpu.memory_space<semaphore_mem>> -> memref<!tpu.dma_semaphore, #tpu.memory_space<semaphore_mem>>
    tpu.enqueue_dma source(%36 : memref<1x128xf32, #tpu.memory_space<any>>) target(%38 : memref<1x128xf32, #tpu.memory_space<vmem>>) target_semaphore(%40 : memref<!tpu.dma_semaphore, #tpu.memory_space<semaphore_mem>>)
    %c0_i32_31 = arith.constant 0 : i32
    %41 = arith.addi %0, %c0_i32_31 : i32
    %42 = arith.index_cast %41 : i32 to index
    %c5 = arith.constant 5 : index
    %43 = memref.load %arg1[%42, %c5] : memref<2x8xi32, #tpu.memory_space<smem>>
    %c0_i32_32 = arith.constant 0 : i32
    %c0_i32_33 = arith.constant 0 : i32
    %c5_i32 = arith.constant 5 : i32
    %c0_i32_34 = arith.constant 0 : i32
    %44 = tpu.memref_slice %arg2[%43, %c0_i32_34] : memref<64x128xf32, #tpu.memory_space<any>> -> memref<1x128xf32, #tpu.memory_space<any>>
    %c5_i32_35 = arith.constant 5 : i32
    %c0_i32_36 = arith.constant 0 : i32
    %45 = tpu.memref_slice %arg5[%c0_i32_32, %c5_i32_35, %c0_i32_36] : memref<2x8x128xf32, #tpu.memory_space<vmem>> -> memref<1x1x128xf32, #tpu.memory_space<vmem>>
    %46 = tpu.memref_squeeze %45 : memref<1x1x128xf32, #tpu.memory_space<vmem>> -> memref<1x128xf32, #tpu.memory_space<vmem>>
    %47 = tpu.memref_slice %arg6[%c0_i32_33, %c5_i32] : memref<2x8x!tpu.dma_semaphore, #tpu.memory_space<semaphore_mem>> -> memref<1x1x!tpu.dma_semaphore, #tpu.memory_space<semaphore_mem>>
    %48 = tpu.memref_squeeze %47 : memref<1x1x!tpu.dma_semaphore, #tpu.memory_space<semaphore_mem>> -> memref<!tpu.dma_semaphore, #tpu.memory_space<semaphore_mem>>
    tpu.enqueue_dma source(%44 : memref<1x128xf32, #tpu.memory_space<any>>) target(%46 : memref<1x128xf32, #tpu.memory_space<vmem>>) target_semaphore(%48 : memref<!tpu.dma_semaphore, #tpu.memory_space<semaphore_mem>>)
    %c0_i32_37 = arith.constant 0 : i32
    %49 = arith.addi %0, %c0_i32_37 : i32
    %50 = arith.index_cast %49 : i32 to index
    %c6 = arith.constant 6 : index
    %51 = memref.load %arg1[%50, %c6] : memref<2x8xi32, #tpu.memory_space<smem>>
    %c0_i32_38 = arith.constant 0 : i32
    %c0_i32_39 = arith.constant 0 : i32
    %c6_i32 = arith.constant 6 : i32
    %c0_i32_40 = arith.constant 0 : i32
    %52 = tpu.memref_slice %arg2[%51, %c0_i32_40] : memref<64x128xf32, #tpu.memory_space<any>> -> memref<1x128xf32, #tpu.memory_space<any>>
    %c6_i32_41 = arith.constant 6 : i32
    %c0_i32_42 = arith.constant 0 : i32
    %53 = tpu.memref_slice %arg5[%c0_i32_38, %c6_i32_41, %c0_i32_42] : memref<2x8x128xf32, #tpu.memory_space<vmem>> -> memref<1x1x128xf32, #tpu.memory_space<vmem>>
    %54 = tpu.memref_squeeze %53 : memref<1x1x128xf32, #tpu.memory_space<vmem>> -> memref<1x128xf32, #tpu.memory_space<vmem>>
    %55 = tpu.memref_slice %arg6[%c0_i32_39, %c6_i32] : memref<2x8x!tpu.dma_semaphore, #tpu.memory_space<semaphore_mem>> -> memref<1x1x!tpu.dma_semaphore, #tpu.memory_space<semaphore_mem>>
    %56 = tpu.memref_squeeze %55 : memref<1x1x!tpu.dma_semaphore, #tpu.memory_space<semaphore_mem>> -> memref<!tpu.dma_semaphore, #tpu.memory_space<semaphore_mem>>
    tpu.enqueue_dma source(%52 : memref<1x128xf32, #tpu.memory_space<any>>) target(%54 : memref<1x128xf32, #tpu.memory_space<vmem>>) target_semaphore(%56 : memref<!tpu.dma_semaphore, #tpu.memory_space<semaphore_mem>>)
    %c0_i32_43 = arith.constant 0 : i32
    %57 = arith.addi %0, %c0_i32_43 : i32
    %58 = arith.index_cast %57 : i32 to index
    %c7 = arith.constant 7 : index
    %59 = memref.load %arg1[%58, %c7] : memref<2x8xi32, #tpu.memory_space<smem>>
    %c0_i32_44 = arith.constant 0 : i32
    %c0_i32_45 = arith.constant 0 : i32
    %c7_i32 = arith.constant 7 : i32
    %c0_i32_46 = arith.constant 0 : i32
    %60 = tpu.memref_slice %arg2[%59, %c0_i32_46] : memref<64x128xf32, #tpu.memory_space<any>> -> memref<1x128xf32, #tpu.memory_space<any>>
    %c7_i32_47 = arith.constant 7 : i32
    %c0_i32_48 = arith.constant 0 : i32
    %61 = tpu.memref_slice %arg5[%c0_i32_44, %c7_i32_47, %c0_i32_48] : memref<2x8x128xf32, #tpu.memory_space<vmem>> -> memref<1x1x128xf32, #tpu.memory_space<vmem>>
    %62 = tpu.memref_squeeze %61 : memref<1x1x128xf32, #tpu.memory_space<vmem>> -> memref<1x128xf32, #tpu.memory_space<vmem>>
    %63 = tpu.memref_slice %arg6[%c0_i32_45, %c7_i32] : memref<2x8x!tpu.dma_semaphore, #tpu.memory_space<semaphore_mem>> -> memref<1x1x!tpu.dma_semaphore, #tpu.memory_space<semaphore_mem>>
    %64 = tpu.memref_squeeze %63 : memref<1x1x!tpu.dma_semaphore, #tpu.memory_space<semaphore_mem>> -> memref<!tpu.dma_semaphore, #tpu.memory_space<semaphore_mem>>
    tpu.enqueue_dma source(%60 : memref<1x128xf32, #tpu.memory_space<any>>) target(%62 : memref<1x128xf32, #tpu.memory_space<vmem>>) target_semaphore(%64 : memref<!tpu.dma_semaphore, #tpu.memory_space<semaphore_mem>>)
    %c1_i32_49 = arith.constant 1 : i32
    %65 = arith.addi %0, %c1_i32_49 : i32
    %66 = arith.index_cast %65 : i32 to index
    %c0_50 = arith.constant 0 : index
    %67 = memref.load %arg1[%66, %c0_50] : memref<2x8xi32, #tpu.memory_space<smem>>
    %c1_i32_51 = arith.constant 1 : i32
    %c1_i32_52 = arith.constant 1 : i32
    %c0_i32_53 = arith.constant 0 : i32
    %c0_i32_54 = arith.constant 0 : i32
    %68 = tpu.memref_slice %arg2[%67, %c0_i32_54] : memref<64x128xf32, #tpu.memory_space<any>> -> memref<1x128xf32, #tpu.memory_space<any>>
    %c0_i32_55 = arith.constant 0 : i32
    %c0_i32_56 = arith.constant 0 : i32
    %69 = tpu.memref_slice %arg5[%c1_i32_51, %c0_i32_55, %c0_i32_56] : memref<2x8x128xf32, #tpu.memory_space<vmem>> -> memref<1x1x128xf32, #tpu.memory_space<vmem>>
    %70 = tpu.memref_squeeze %69 : memref<1x1x128xf32, #tpu.memory_space<vmem>> -> memref<1x128xf32, #tpu.memory_space<vmem>>
    %71 = tpu.memref_slice %arg6[%c1_i32_52, %c0_i32_53] : memref<2x8x!tpu.dma_semaphore, #tpu.memory_space<semaphore_mem>> -> memref<1x1x!tpu.dma_semaphore, #tpu.memory_space<semaphore_mem>>
    %72 = tpu.memref_squeeze %71 : memref<1x1x!tpu.dma_semaphore, #tpu.memory_space<semaphore_mem>> -> memref<!tpu.dma_semaphore, #tpu.memory_space<semaphore_mem>>
    tpu.enqueue_dma source(%68 : memref<1x128xf32, #tpu.memory_space<any>>) target(%70 : memref<1x128xf32, #tpu.memory_space<vmem>>) target_semaphore(%72 : memref<!tpu.dma_semaphore, #tpu.memory_space<semaphore_mem>>)
    %c1_i32_57 = arith.constant 1 : i32
    %73 = arith.addi %0, %c1_i32_57 : i32
    %74 = arith.index_cast %73 : i32 to index
    %c1_58 = arith.constant 1 : index
    %75 = memref.load %arg1[%74, %c1_58] : memref<2x8xi32, #tpu.memory_space<smem>>
    %c1_i32_59 = arith.constant 1 : i32
    %c1_i32_60 = arith.constant 1 : i32
    %c1_i32_61 = arith.constant 1 : i32
    %c0_i32_62 = arith.constant 0 : i32
    %76 = tpu.memref_slice %arg2[%75, %c0_i32_62] : memref<64x128xf32, #tpu.memory_space<any>> -> memref<1x128xf32, #tpu.memory_space<any>>
    %c1_i32_63 = arith.constant 1 : i32
    %c0_i32_64 = arith.constant 0 : i32
    %77 = tpu.memref_slice %arg5[%c1_i32_59, %c1_i32_63, %c0_i32_64] : memref<2x8x128xf32, #tpu.memory_space<vmem>> -> memref<1x1x128xf32, #tpu.memory_space<vmem>>
    %78 = tpu.memref_squeeze %77 : memref<1x1x128xf32, #tpu.memory_space<vmem>> -> memref<1x128xf32, #tpu.memory_space<vmem>>
    %79 = tpu.memref_slice %arg6[%c1_i32_60, %c1_i32_61] : memref<2x8x!tpu.dma_semaphore, #tpu.memory_space<semaphore_mem>> -> memref<1x1x!tpu.dma_semaphore, #tpu.memory_space<semaphore_mem>>
    %80 = tpu.memref_squeeze %79 : memref<1x1x!tpu.dma_semaphore, #tpu.memory_space<semaphore_mem>> -> memref<!tpu.dma_semaphore, #tpu.memory_space<semaphore_mem>>
    tpu.enqueue_dma source(%76 : memref<1x128xf32, #tpu.memory_space<any>>) target(%78 : memref<1x128xf32, #tpu.memory_space<vmem>>) target_semaphore(%80 : memref<!tpu.dma_semaphore, #tpu.memory_space<semaphore_mem>>)
    %c1_i32_65 = arith.constant 1 : i32
    %81 = arith.addi %0, %c1_i32_65 : i32
    %82 = arith.index_cast %81 : i32 to index
    %c2_66 = arith.constant 2 : index
    %83 = memref.load %arg1[%82, %c2_66] : memref<2x8xi32, #tpu.memory_space<smem>>
    %c1_i32_67 = arith.constant 1 : i32
    %c1_i32_68 = arith.constant 1 : i32
    %c2_i32_69 = arith.constant 2 : i32
    %c0_i32_70 = arith.constant 0 : i32
    %84 = tpu.memref_slice %arg2[%83, %c0_i32_70] : memref<64x128xf32, #tpu.memory_space<any>> -> memref<1x128xf32, #tpu.memory_space<any>>
    %c2_i32_71 = arith.constant 2 : i32
    %c0_i32_72 = arith.constant 0 : i32
    %85 = tpu.memref_slice %arg5[%c1_i32_67, %c2_i32_71, %c0_i32_72] : memref<2x8x128xf32, #tpu.memory_space<vmem>> -> memref<1x1x128xf32, #tpu.memory_space<vmem>>
    %86 = tpu.memref_squeeze %85 : memref<1x1x128xf32, #tpu.memory_space<vmem>> -> memref<1x128xf32, #tpu.memory_space<vmem>>
    %87 = tpu.memref_slice %arg6[%c1_i32_68, %c2_i32_69] : memref<2x8x!tpu.dma_semaphore, #tpu.memory_space<semaphore_mem>> -> memref<1x1x!tpu.dma_semaphore, #tpu.memory_space<semaphore_mem>>
    %88 = tpu.memref_squeeze %87 : memref<1x1x!tpu.dma_semaphore, #tpu.memory_space<semaphore_mem>> -> memref<!tpu.dma_semaphore, #tpu.memory_space<semaphore_mem>>
    tpu.enqueue_dma source(%84 : memref<1x128xf32, #tpu.memory_space<any>>) target(%86 : memref<1x128xf32, #tpu.memory_space<vmem>>) target_semaphore(%88 : memref<!tpu.dma_semaphore, #tpu.memory_space<semaphore_mem>>)
    %c1_i32_73 = arith.constant 1 : i32
    %89 = arith.addi %0, %c1_i32_73 : i32
    %90 = arith.index_cast %89 : i32 to index
    %c3_74 = arith.constant 3 : index
    %91 = memref.load %arg1[%90, %c3_74] : memref<2x8xi32, #tpu.memory_space<smem>>
    %c1_i32_75 = arith.constant 1 : i32
    %c1_i32_76 = arith.constant 1 : i32
    %c3_i32_77 = arith.constant 3 : i32
    %c0_i32_78 = arith.constant 0 : i32
    %92 = tpu.memref_slice %arg2[%91, %c0_i32_78] : memref<64x128xf32, #tpu.memory_space<any>> -> memref<1x128xf32, #tpu.memory_space<any>>
    %c3_i32_79 = arith.constant 3 : i32
    %c0_i32_80 = arith.constant 0 : i32
    %93 = tpu.memref_slice %arg5[%c1_i32_75, %c3_i32_79, %c0_i32_80] : memref<2x8x128xf32, #tpu.memory_space<vmem>> -> memref<1x1x128xf32, #tpu.memory_space<vmem>>
    %94 = tpu.memref_squeeze %93 : memref<1x1x128xf32, #tpu.memory_space<vmem>> -> memref<1x128xf32, #tpu.memory_space<vmem>>
    %95 = tpu.memref_slice %arg6[%c1_i32_76, %c3_i32_77] : memref<2x8x!tpu.dma_semaphore, #tpu.memory_space<semaphore_mem>> -> memref<1x1x!tpu.dma_semaphore, #tpu.memory_space<semaphore_mem>>
    %96 = tpu.memref_squeeze %95 : memref<1x1x!tpu.dma_semaphore, #tpu.memory_space<semaphore_mem>> -> memref<!tpu.dma_semaphore, #tpu.memory_space<semaphore_mem>>
    tpu.enqueue_dma source(%92 : memref<1x128xf32, #tpu.memory_space<any>>) target(%94 : memref<1x128xf32, #tpu.memory_space<vmem>>) target_semaphore(%96 : memref<!tpu.dma_semaphore, #tpu.memory_space<semaphore_mem>>)
    %c1_i32_81 = arith.constant 1 : i32
    %97 = arith.addi %0, %c1_i32_81 : i32
    %98 = arith.index_cast %97 : i32 to index
    %c4_82 = arith.constant 4 : index
    %99 = memref.load %arg1[%98, %c4_82] : memref<2x8xi32, #tpu.memory_space<smem>>
    %c1_i32_83 = arith.constant 1 : i32
    %c1_i32_84 = arith.constant 1 : i32
    %c4_i32_85 = arith.constant 4 : i32
    %c0_i32_86 = arith.constant 0 : i32
    %100 = tpu.memref_slice %arg2[%99, %c0_i32_86] : memref<64x128xf32, #tpu.memory_space<any>> -> memref<1x128xf32, #tpu.memory_space<any>>
    %c4_i32_87 = arith.constant 4 : i32
    %c0_i32_88 = arith.constant 0 : i32
    %101 = tpu.memref_slice %arg5[%c1_i32_83, %c4_i32_87, %c0_i32_88] : memref<2x8x128xf32, #tpu.memory_space<vmem>> -> memref<1x1x128xf32, #tpu.memory_space<vmem>>
    %102 = tpu.memref_squeeze %101 : memref<1x1x128xf32, #tpu.memory_space<vmem>> -> memref<1x128xf32, #tpu.memory_space<vmem>>
    %103 = tpu.memref_slice %arg6[%c1_i32_84, %c4_i32_85] : memref<2x8x!tpu.dma_semaphore, #tpu.memory_space<semaphore_mem>> -> memref<1x1x!tpu.dma_semaphore, #tpu.memory_space<semaphore_mem>>
    %104 = tpu.memref_squeeze %103 : memref<1x1x!tpu.dma_semaphore, #tpu.memory_space<semaphore_mem>> -> memref<!tpu.dma_semaphore, #tpu.memory_space<semaphore_mem>>
    tpu.enqueue_dma source(%100 : memref<1x128xf32, #tpu.memory_space<any>>) target(%102 : memref<1x128xf32, #tpu.memory_space<vmem>>) target_semaphore(%104 : memref<!tpu.dma_semaphore, #tpu.memory_space<semaphore_mem>>)
    %c1_i32_89 = arith.constant 1 : i32
    %105 = arith.addi %0, %c1_i32_89 : i32
    %106 = arith.index_cast %105 : i32 to index
    %c5_90 = arith.constant 5 : index
    %107 = memref.load %arg1[%106, %c5_90] : memref<2x8xi32, #tpu.memory_space<smem>>
    %c1_i32_91 = arith.constant 1 : i32
    %c1_i32_92 = arith.constant 1 : i32
    %c5_i32_93 = arith.constant 5 : i32
    %c0_i32_94 = arith.constant 0 : i32
    %108 = tpu.memref_slice %arg2[%107, %c0_i32_94] : memref<64x128xf32, #tpu.memory_space<any>> -> memref<1x128xf32, #tpu.memory_space<any>>
    %c5_i32_95 = arith.constant 5 : i32
    %c0_i32_96 = arith.constant 0 : i32
    %109 = tpu.memref_slice %arg5[%c1_i32_91, %c5_i32_95, %c0_i32_96] : memref<2x8x128xf32, #tpu.memory_space<vmem>> -> memref<1x1x128xf32, #tpu.memory_space<vmem>>
    %110 = tpu.memref_squeeze %109 : memref<1x1x128xf32, #tpu.memory_space<vmem>> -> memref<1x128xf32, #tpu.memory_space<vmem>>
    %111 = tpu.memref_slice %arg6[%c1_i32_92, %c5_i32_93] : memref<2x8x!tpu.dma_semaphore, #tpu.memory_space<semaphore_mem>> -> memref<1x1x!tpu.dma_semaphore, #tpu.memory_space<semaphore_mem>>
    %112 = tpu.memref_squeeze %111 : memref<1x1x!tpu.dma_semaphore, #tpu.memory_space<semaphore_mem>> -> memref<!tpu.dma_semaphore, #tpu.memory_space<semaphore_mem>>
    tpu.enqueue_dma source(%108 : memref<1x128xf32, #tpu.memory_space<any>>) target(%110 : memref<1x128xf32, #tpu.memory_space<vmem>>) target_semaphore(%112 : memref<!tpu.dma_semaphore, #tpu.memory_space<semaphore_mem>>)
    %c1_i32_97 = arith.constant 1 : i32
    %113 = arith.addi %0, %c1_i32_97 : i32
    %114 = arith.index_cast %113 : i32 to index
    %c6_98 = arith.constant 6 : index
    %115 = memref.load %arg1[%114, %c6_98] : memref<2x8xi32, #tpu.memory_space<smem>>
    %c1_i32_99 = arith.constant 1 : i32
    %c1_i32_100 = arith.constant 1 : i32
    %c6_i32_101 = arith.constant 6 : i32
    %c0_i32_102 = arith.constant 0 : i32
    %116 = tpu.memref_slice %arg2[%115, %c0_i32_102] : memref<64x128xf32, #tpu.memory_space<any>> -> memref<1x128xf32, #tpu.memory_space<any>>
    %c6_i32_103 = arith.constant 6 : i32
    %c0_i32_104 = arith.constant 0 : i32
    %117 = tpu.memref_slice %arg5[%c1_i32_99, %c6_i32_103, %c0_i32_104] : memref<2x8x128xf32, #tpu.memory_space<vmem>> -> memref<1x1x128xf32, #tpu.memory_space<vmem>>
    %118 = tpu.memref_squeeze %117 : memref<1x1x128xf32, #tpu.memory_space<vmem>> -> memref<1x128xf32, #tpu.memory_space<vmem>>
    %119 = tpu.memref_slice %arg6[%c1_i32_100, %c6_i32_101] : memref<2x8x!tpu.dma_semaphore, #tpu.memory_space<semaphore_mem>> -> memref<1x1x!tpu.dma_semaphore, #tpu.memory_space<semaphore_mem>>
    %120 = tpu.memref_squeeze %119 : memref<1x1x!tpu.dma_semaphore, #tpu.memory_space<semaphore_mem>> -> memref<!tpu.dma_semaphore, #tpu.memory_space<semaphore_mem>>
    tpu.enqueue_dma source(%116 : memref<1x128xf32, #tpu.memory_space<any>>) target(%118 : memref<1x128xf32, #tpu.memory_space<vmem>>) target_semaphore(%120 : memref<!tpu.dma_semaphore, #tpu.memory_space<semaphore_mem>>)
    %c1_i32_105 = arith.constant 1 : i32
    %121 = arith.addi %0, %c1_i32_105 : i32
    %122 = arith.index_cast %121 : i32 to index
    %c7_106 = arith.constant 7 : index
    %123 = memref.load %arg1[%122, %c7_106] : memref<2x8xi32, #tpu.memory_space<smem>>
    %c1_i32_107 = arith.constant 1 : i32
    %c1_i32_108 = arith.constant 1 : i32
    %c7_i32_109 = arith.constant 7 : i32
    %c0_i32_110 = arith.constant 0 : i32
    %124 = tpu.memref_slice %arg2[%123, %c0_i32_110] : memref<64x128xf32, #tpu.memory_space<any>> -> memref<1x128xf32, #tpu.memory_space<any>>
    %c7_i32_111 = arith.constant 7 : i32
    %c0_i32_112 = arith.constant 0 : i32
    %125 = tpu.memref_slice %arg5[%c1_i32_107, %c7_i32_111, %c0_i32_112] : memref<2x8x128xf32, #tpu.memory_space<vmem>> -> memref<1x1x128xf32, #tpu.memory_space<vmem>>
    %126 = tpu.memref_squeeze %125 : memref<1x1x128xf32, #tpu.memory_space<vmem>> -> memref<1x128xf32, #tpu.memory_space<vmem>>
    %127 = tpu.memref_slice %arg6[%c1_i32_108, %c7_i32_109] : memref<2x8x!tpu.dma_semaphore, #tpu.memory_space<semaphore_mem>> -> memref<1x1x!tpu.dma_semaphore, #tpu.memory_space<semaphore_mem>>
    %128 = tpu.memref_squeeze %127 : memref<1x1x!tpu.dma_semaphore, #tpu.memory_space<semaphore_mem>> -> memref<!tpu.dma_semaphore, #tpu.memory_space<semaphore_mem>>
    tpu.enqueue_dma source(%124 : memref<1x128xf32, #tpu.memory_space<any>>) target(%126 : memref<1x128xf32, #tpu.memory_space<vmem>>) target_semaphore(%128 : memref<!tpu.dma_semaphore, #tpu.memory_space<semaphore_mem>>)
    %c0_i32_113 = arith.constant 0 : i32
    %c0_i32_114 = arith.constant 0 : i32
    %c0_i32_115 = arith.constant 0 : i32
    %c0_i32_116 = arith.constant 0 : i32
    %129 = tpu.memref_slice %arg2[%3, %c0_i32_116] : memref<64x128xf32, #tpu.memory_space<any>> -> memref<1x128xf32, #tpu.memory_space<any>>
    %c0_i32_117 = arith.constant 0 : i32
    %c0_i32_118 = arith.constant 0 : i32
    %130 = tpu.memref_slice %arg5[%c0_i32_113, %c0_i32_117, %c0_i32_118] : memref<2x8x128xf32, #tpu.memory_space<vmem>> -> memref<1x1x128xf32, #tpu.memory_space<vmem>>
    %131 = tpu.memref_squeeze %130 : memref<1x1x128xf32, #tpu.memory_space<vmem>> -> memref<1x128xf32, #tpu.memory_space<vmem>>
    %132 = tpu.memref_slice %arg6[%c0_i32_114, %c0_i32_115] : memref<2x8x!tpu.dma_semaphore, #tpu.memory_space<semaphore_mem>> -> memref<1x1x!tpu.dma_semaphore, #tpu.memory_space<semaphore_mem>>
    %133 = tpu.memref_squeeze %132 : memref<1x1x!tpu.dma_semaphore, #tpu.memory_space<semaphore_mem>> -> memref<!tpu.dma_semaphore, #tpu.memory_space<semaphore_mem>>
    tpu.wait_dma2 semaphore(%133 : memref<!tpu.dma_semaphore, #tpu.memory_space<semaphore_mem>>) src(%129 : memref<1x128xf32, #tpu.memory_space<any>>) dst(%131 : memref<1x128xf32, #tpu.memory_space<vmem>>)
    %c0_i32_119 = arith.constant 0 : i32
    %c0_i32_120 = arith.constant 0 : i32
    %c1_i32_121 = arith.constant 1 : i32
    %c0_i32_122 = arith.constant 0 : i32
    %134 = tpu.memref_slice %arg2[%11, %c0_i32_122] : memref<64x128xf32, #tpu.memory_space<any>> -> memref<1x128xf32, #tpu.memory_space<any>>
    %c1_i32_123 = arith.constant 1 : i32
    %c0_i32_124 = arith.constant 0 : i32
    %135 = tpu.memref_slice %arg5[%c0_i32_119, %c1_i32_123, %c0_i32_124] : memref<2x8x128xf32, #tpu.memory_space<vmem>> -> memref<1x1x128xf32, #tpu.memory_space<vmem>>
    %136 = tpu.memref_squeeze %135 : memref<1x1x128xf32, #tpu.memory_space<vmem>> -> memref<1x128xf32, #tpu.memory_space<vmem>>
    %137 = tpu.memref_slice %arg6[%c0_i32_120, %c1_i32_121] : memref<2x8x!tpu.dma_semaphore, #tpu.memory_space<semaphore_mem>> -> memref<1x1x!tpu.dma_semaphore, #tpu.memory_space<semaphore_mem>>
    %138 = tpu.memref_squeeze %137 : memref<1x1x!tpu.dma_semaphore, #tpu.memory_space<semaphore_mem>> -> memref<!tpu.dma_semaphore, #tpu.memory_space<semaphore_mem>>
    tpu.wait_dma2 semaphore(%138 : memref<!tpu.dma_semaphore, #tpu.memory_space<semaphore_mem>>) src(%134 : memref<1x128xf32, #tpu.memory_space<any>>) dst(%136 : memref<1x128xf32, #tpu.memory_space<vmem>>)
    %c0_i32_125 = arith.constant 0 : i32
    %c0_i32_126 = arith.constant 0 : i32
    %c2_i32_127 = arith.constant 2 : i32
    %c0_i32_128 = arith.constant 0 : i32
    %139 = tpu.memref_slice %arg2[%19, %c0_i32_128] : memref<64x128xf32, #tpu.memory_space<any>> -> memref<1x128xf32, #tpu.memory_space<any>>
    %c2_i32_129 = arith.constant 2 : i32
    %c0_i32_130 = arith.constant 0 : i32
    %140 = tpu.memref_slice %arg5[%c0_i32_125, %c2_i32_129, %c0_i32_130] : memref<2x8x128xf32, #tpu.memory_space<vmem>> -> memref<1x1x128xf32, #tpu.memory_space<vmem>>
    %141 = tpu.memref_squeeze %140 : memref<1x1x128xf32, #tpu.memory_space<vmem>> -> memref<1x128xf32, #tpu.memory_space<vmem>>
    %142 = tpu.memref_slice %arg6[%c0_i32_126, %c2_i32_127] : memref<2x8x!tpu.dma_semaphore, #tpu.memory_space<semaphore_mem>> -> memref<1x1x!tpu.dma_semaphore, #tpu.memory_space<semaphore_mem>>
    %143 = tpu.memref_squeeze %142 : memref<1x1x!tpu.dma_semaphore, #tpu.memory_space<semaphore_mem>> -> memref<!tpu.dma_semaphore, #tpu.memory_space<semaphore_mem>>
    tpu.wait_dma2 semaphore(%143 : memref<!tpu.dma_semaphore, #tpu.memory_space<semaphore_mem>>) src(%139 : memref<1x128xf32, #tpu.memory_space<any>>) dst(%141 : memref<1x128xf32, #tpu.memory_space<vmem>>)
    %c0_i32_131 = arith.constant 0 : i32
    %c0_i32_132 = arith.constant 0 : i32
    %c3_i32_133 = arith.constant 3 : i32
    %c0_i32_134 = arith.constant 0 : i32
    %144 = tpu.memref_slice %arg2[%27, %c0_i32_134] : memref<64x128xf32, #tpu.memory_space<any>> -> memref<1x128xf32, #tpu.memory_space<any>>
    %c3_i32_135 = arith.constant 3 : i32
    %c0_i32_136 = arith.constant 0 : i32
    %145 = tpu.memref_slice %arg5[%c0_i32_131, %c3_i32_135, %c0_i32_136] : memref<2x8x128xf32, #tpu.memory_space<vmem>> -> memref<1x1x128xf32, #tpu.memory_space<vmem>>
    %146 = tpu.memref_squeeze %145 : memref<1x1x128xf32, #tpu.memory_space<vmem>> -> memref<1x128xf32, #tpu.memory_space<vmem>>
    %147 = tpu.memref_slice %arg6[%c0_i32_132, %c3_i32_133] : memref<2x8x!tpu.dma_semaphore, #tpu.memory_space<semaphore_mem>> -> memref<1x1x!tpu.dma_semaphore, #tpu.memory_space<semaphore_mem>>
    %148 = tpu.memref_squeeze %147 : memref<1x1x!tpu.dma_semaphore, #tpu.memory_space<semaphore_mem>> -> memref<!tpu.dma_semaphore, #tpu.memory_space<semaphore_mem>>
    tpu.wait_dma2 semaphore(%148 : memref<!tpu.dma_semaphore, #tpu.memory_space<semaphore_mem>>) src(%144 : memref<1x128xf32, #tpu.memory_space<any>>) dst(%146 : memref<1x128xf32, #tpu.memory_space<vmem>>)
    %c0_i32_137 = arith.constant 0 : i32
    %c0_i32_138 = arith.constant 0 : i32
    %c4_i32_139 = arith.constant 4 : i32
    %c0_i32_140 = arith.constant 0 : i32
    %149 = tpu.memref_slice %arg2[%35, %c0_i32_140] : memref<64x128xf32, #tpu.memory_space<any>> -> memref<1x128xf32, #tpu.memory_space<any>>
    %c4_i32_141 = arith.constant 4 : i32
    %c0_i32_142 = arith.constant 0 : i32
    %150 = tpu.memref_slice %arg5[%c0_i32_137, %c4_i32_141, %c0_i32_142] : memref<2x8x128xf32, #tpu.memory_space<vmem>> -> memref<1x1x128xf32, #tpu.memory_space<vmem>>
    %151 = tpu.memref_squeeze %150 : memref<1x1x128xf32, #tpu.memory_space<vmem>> -> memref<1x128xf32, #tpu.memory_space<vmem>>
    %152 = tpu.memref_slice %arg6[%c0_i32_138, %c4_i32_139] : memref<2x8x!tpu.dma_semaphore, #tpu.memory_space<semaphore_mem>> -> memref<1x1x!tpu.dma_semaphore, #tpu.memory_space<semaphore_mem>>
    %153 = tpu.memref_squeeze %152 : memref<1x1x!tpu.dma_semaphore, #tpu.memory_space<semaphore_mem>> -> memref<!tpu.dma_semaphore, #tpu.memory_space<semaphore_mem>>
    tpu.wait_dma2 semaphore(%153 : memref<!tpu.dma_semaphore, #tpu.memory_space<semaphore_mem>>) src(%149 : memref<1x128xf32, #tpu.memory_space<any>>) dst(%151 : memref<1x128xf32, #tpu.memory_space<vmem>>)
    %c0_i32_143 = arith.constant 0 : i32
    %c0_i32_144 = arith.constant 0 : i32
    %c5_i32_145 = arith.constant 5 : i32
    %c0_i32_146 = arith.constant 0 : i32
    %154 = tpu.memref_slice %arg2[%43, %c0_i32_146] : memref<64x128xf32, #tpu.memory_space<any>> -> memref<1x128xf32, #tpu.memory_space<any>>
    %c5_i32_147 = arith.constant 5 : i32
    %c0_i32_148 = arith.constant 0 : i32
    %155 = tpu.memref_slice %arg5[%c0_i32_143, %c5_i32_147, %c0_i32_148] : memref<2x8x128xf32, #tpu.memory_space<vmem>> -> memref<1x1x128xf32, #tpu.memory_space<vmem>>
    %156 = tpu.memref_squeeze %155 : memref<1x1x128xf32, #tpu.memory_space<vmem>> -> memref<1x128xf32, #tpu.memory_space<vmem>>
    %157 = tpu.memref_slice %arg6[%c0_i32_144, %c5_i32_145] : memref<2x8x!tpu.dma_semaphore, #tpu.memory_space<semaphore_mem>> -> memref<1x1x!tpu.dma_semaphore, #tpu.memory_space<semaphore_mem>>
    %158 = tpu.memref_squeeze %157 : memref<1x1x!tpu.dma_semaphore, #tpu.memory_space<semaphore_mem>> -> memref<!tpu.dma_semaphore, #tpu.memory_space<semaphore_mem>>
    tpu.wait_dma2 semaphore(%158 : memref<!tpu.dma_semaphore, #tpu.memory_space<semaphore_mem>>) src(%154 : memref<1x128xf32, #tpu.memory_space<any>>) dst(%156 : memref<1x128xf32, #tpu.memory_space<vmem>>)
    %c0_i32_149 = arith.constant 0 : i32
    %c0_i32_150 = arith.constant 0 : i32
    %c6_i32_151 = arith.constant 6 : i32
    %c0_i32_152 = arith.constant 0 : i32
    %159 = tpu.memref_slice %arg2[%51, %c0_i32_152] : memref<64x128xf32, #tpu.memory_space<any>> -> memref<1x128xf32, #tpu.memory_space<any>>
    %c6_i32_153 = arith.constant 6 : i32
    %c0_i32_154 = arith.constant 0 : i32
    %160 = tpu.memref_slice %arg5[%c0_i32_149, %c6_i32_153, %c0_i32_154] : memref<2x8x128xf32, #tpu.memory_space<vmem>> -> memref<1x1x128xf32, #tpu.memory_space<vmem>>
    %161 = tpu.memref_squeeze %160 : memref<1x1x128xf32, #tpu.memory_space<vmem>> -> memref<1x128xf32, #tpu.memory_space<vmem>>
    %162 = tpu.memref_slice %arg6[%c0_i32_150, %c6_i32_151] : memref<2x8x!tpu.dma_semaphore, #tpu.memory_space<semaphore_mem>> -> memref<1x1x!tpu.dma_semaphore, #tpu.memory_space<semaphore_mem>>
    %163 = tpu.memref_squeeze %162 : memref<1x1x!tpu.dma_semaphore, #tpu.memory_space<semaphore_mem>> -> memref<!tpu.dma_semaphore, #tpu.memory_space<semaphore_mem>>
    tpu.wait_dma2 semaphore(%163 : memref<!tpu.dma_semaphore, #tpu.memory_space<semaphore_mem>>) src(%159 : memref<1x128xf32, #tpu.memory_space<any>>) dst(%161 : memref<1x128xf32, #tpu.memory_space<vmem>>)
    %c0_i32_155 = arith.constant 0 : i32
    %c0_i32_156 = arith.constant 0 : i32
    %c7_i32_157 = arith.constant 7 : i32
    %c0_i32_158 = arith.constant 0 : i32
    %164 = tpu.memref_slice %arg2[%59, %c0_i32_158] : memref<64x128xf32, #tpu.memory_space<any>> -> memref<1x128xf32, #tpu.memory_space<any>>
    %c7_i32_159 = arith.constant 7 : i32
    %c0_i32_160 = arith.constant 0 : i32
    %165 = tpu.memref_slice %arg5[%c0_i32_155, %c7_i32_159, %c0_i32_160] : memref<2x8x128xf32, #tpu.memory_space<vmem>> -> memref<1x1x128xf32, #tpu.memory_space<vmem>>
    %166 = tpu.memref_squeeze %165 : memref<1x1x128xf32, #tpu.memory_space<vmem>> -> memref<1x128xf32, #tpu.memory_space<vmem>>
    %167 = tpu.memref_slice %arg6[%c0_i32_156, %c7_i32_157] : memref<2x8x!tpu.dma_semaphore, #tpu.memory_space<semaphore_mem>> -> memref<1x1x!tpu.dma_semaphore, #tpu.memory_space<semaphore_mem>>
    %168 = tpu.memref_squeeze %167 : memref<1x1x!tpu.dma_semaphore, #tpu.memory_space<semaphore_mem>> -> memref<!tpu.dma_semaphore, #tpu.memory_space<semaphore_mem>>
    tpu.wait_dma2 semaphore(%168 : memref<!tpu.dma_semaphore, #tpu.memory_space<semaphore_mem>>) src(%164 : memref<1x128xf32, #tpu.memory_space<any>>) dst(%166 : memref<1x128xf32, #tpu.memory_space<vmem>>)
    %c1_i32_161 = arith.constant 1 : i32
    %c1_i32_162 = arith.constant 1 : i32
    %c0_i32_163 = arith.constant 0 : i32
    %c0_i32_164 = arith.constant 0 : i32
    %169 = tpu.memref_slice %arg2[%67, %c0_i32_164] : memref<64x128xf32, #tpu.memory_space<any>> -> memref<1x128xf32, #tpu.memory_space<any>>
    %c0_i32_165 = arith.constant 0 : i32
    %c0_i32_166 = arith.constant 0 : i32
    %170 = tpu.memref_slice %arg5[%c1_i32_161, %c0_i32_165, %c0_i32_166] : memref<2x8x128xf32, #tpu.memory_space<vmem>> -> memref<1x1x128xf32, #tpu.memory_space<vmem>>
    %171 = tpu.memref_squeeze %170 : memref<1x1x128xf32, #tpu.memory_space<vmem>> -> memref<1x128xf32, #tpu.memory_space<vmem>>
    %172 = tpu.memref_slice %arg6[%c1_i32_162, %c0_i32_163] : memref<2x8x!tpu.dma_semaphore, #tpu.memory_space<semaphore_mem>> -> memref<1x1x!tpu.dma_semaphore, #tpu.memory_space<semaphore_mem>>
    %173 = tpu.memref_squeeze %172 : memref<1x1x!tpu.dma_semaphore, #tpu.memory_space<semaphore_mem>> -> memref<!tpu.dma_semaphore, #tpu.memory_space<semaphore_mem>>
    tpu.wait_dma2 semaphore(%173 : memref<!tpu.dma_semaphore, #tpu.memory_space<semaphore_mem>>) src(%169 : memref<1x128xf32, #tpu.memory_space<any>>) dst(%171 : memref<1x128xf32, #tpu.memory_space<vmem>>)
    %c1_i32_167 = arith.constant 1 : i32
    %c1_i32_168 = arith.constant 1 : i32
    %c1_i32_169 = arith.constant 1 : i32
    %c0_i32_170 = arith.constant 0 : i32
    %174 = tpu.memref_slice %arg2[%75, %c0_i32_170] : memref<64x128xf32, #tpu.memory_space<any>> -> memref<1x128xf32, #tpu.memory_space<any>>
    %c1_i32_171 = arith.constant 1 : i32
    %c0_i32_172 = arith.constant 0 : i32
    %175 = tpu.memref_slice %arg5[%c1_i32_167, %c1_i32_171, %c0_i32_172] : memref<2x8x128xf32, #tpu.memory_space<vmem>> -> memref<1x1x128xf32, #tpu.memory_space<vmem>>
    %176 = tpu.memref_squeeze %175 : memref<1x1x128xf32, #tpu.memory_space<vmem>> -> memref<1x128xf32, #tpu.memory_space<vmem>>
    %177 = tpu.memref_slice %arg6[%c1_i32_168, %c1_i32_169] : memref<2x8x!tpu.dma_semaphore, #tpu.memory_space<semaphore_mem>> -> memref<1x1x!tpu.dma_semaphore, #tpu.memory_space<semaphore_mem>>
    %178 = tpu.memref_squeeze %177 : memref<1x1x!tpu.dma_semaphore, #tpu.memory_space<semaphore_mem>> -> memref<!tpu.dma_semaphore, #tpu.memory_space<semaphore_mem>>
    tpu.wait_dma2 semaphore(%178 : memref<!tpu.dma_semaphore, #tpu.memory_space<semaphore_mem>>) src(%174 : memref<1x128xf32, #tpu.memory_space<any>>) dst(%176 : memref<1x128xf32, #tpu.memory_space<vmem>>)
    %c1_i32_173 = arith.constant 1 : i32
    %c1_i32_174 = arith.constant 1 : i32
    %c2_i32_175 = arith.constant 2 : i32
    %c0_i32_176 = arith.constant 0 : i32
    %179 = tpu.memref_slice %arg2[%83, %c0_i32_176] : memref<64x128xf32, #tpu.memory_space<any>> -> memref<1x128xf32, #tpu.memory_space<any>>
    %c2_i32_177 = arith.constant 2 : i32
    %c0_i32_178 = arith.constant 0 : i32
    %180 = tpu.memref_slice %arg5[%c1_i32_173, %c2_i32_177, %c0_i32_178] : memref<2x8x128xf32, #tpu.memory_space<vmem>> -> memref<1x1x128xf32, #tpu.memory_space<vmem>>
    %181 = tpu.memref_squeeze %180 : memref<1x1x128xf32, #tpu.memory_space<vmem>> -> memref<1x128xf32, #tpu.memory_space<vmem>>
    %182 = tpu.memref_slice %arg6[%c1_i32_174, %c2_i32_175] : memref<2x8x!tpu.dma_semaphore, #tpu.memory_space<semaphore_mem>> -> memref<1x1x!tpu.dma_semaphore, #tpu.memory_space<semaphore_mem>>
    %183 = tpu.memref_squeeze %182 : memref<1x1x!tpu.dma_semaphore, #tpu.memory_space<semaphore_mem>> -> memref<!tpu.dma_semaphore, #tpu.memory_space<semaphore_mem>>
    tpu.wait_dma2 semaphore(%183 : memref<!tpu.dma_semaphore, #tpu.memory_space<semaphore_mem>>) src(%179 : memref<1x128xf32, #tpu.memory_space<any>>) dst(%181 : memref<1x128xf32, #tpu.memory_space<vmem>>)
    %c1_i32_179 = arith.constant 1 : i32
    %c1_i32_180 = arith.constant 1 : i32
    %c3_i32_181 = arith.constant 3 : i32
    %c0_i32_182 = arith.constant 0 : i32
    %184 = tpu.memref_slice %arg2[%91, %c0_i32_182] : memref<64x128xf32, #tpu.memory_space<any>> -> memref<1x128xf32, #tpu.memory_space<any>>
    %c3_i32_183 = arith.constant 3 : i32
    %c0_i32_184 = arith.constant 0 : i32
    %185 = tpu.memref_slice %arg5[%c1_i32_179, %c3_i32_183, %c0_i32_184] : memref<2x8x128xf32, #tpu.memory_space<vmem>> -> memref<1x1x128xf32, #tpu.memory_space<vmem>>
    %186 = tpu.memref_squeeze %185 : memref<1x1x128xf32, #tpu.memory_space<vmem>> -> memref<1x128xf32, #tpu.memory_space<vmem>>
    %187 = tpu.memref_slice %arg6[%c1_i32_180, %c3_i32_181] : memref<2x8x!tpu.dma_semaphore, #tpu.memory_space<semaphore_mem>> -> memref<1x1x!tpu.dma_semaphore, #tpu.memory_space<semaphore_mem>>
    %188 = tpu.memref_squeeze %187 : memref<1x1x!tpu.dma_semaphore, #tpu.memory_space<semaphore_mem>> -> memref<!tpu.dma_semaphore, #tpu.memory_space<semaphore_mem>>
    tpu.wait_dma2 semaphore(%188 : memref<!tpu.dma_semaphore, #tpu.memory_space<semaphore_mem>>) src(%184 : memref<1x128xf32, #tpu.memory_space<any>>) dst(%186 : memref<1x128xf32, #tpu.memory_space<vmem>>)
    %c1_i32_185 = arith.constant 1 : i32
    %c1_i32_186 = arith.constant 1 : i32
    %c4_i32_187 = arith.constant 4 : i32
    %c0_i32_188 = arith.constant 0 : i32
    %189 = tpu.memref_slice %arg2[%99, %c0_i32_188] : memref<64x128xf32, #tpu.memory_space<any>> -> memref<1x128xf32, #tpu.memory_space<any>>
    %c4_i32_189 = arith.constant 4 : i32
    %c0_i32_190 = arith.constant 0 : i32
    %190 = tpu.memref_slice %arg5[%c1_i32_185, %c4_i32_189, %c0_i32_190] : memref<2x8x128xf32, #tpu.memory_space<vmem>> -> memref<1x1x128xf32, #tpu.memory_space<vmem>>
    %191 = tpu.memref_squeeze %190 : memref<1x1x128xf32, #tpu.memory_space<vmem>> -> memref<1x128xf32, #tpu.memory_space<vmem>>
    %192 = tpu.memref_slice %arg6[%c1_i32_186, %c4_i32_187] : memref<2x8x!tpu.dma_semaphore, #tpu.memory_space<semaphore_mem>> -> memref<1x1x!tpu.dma_semaphore, #tpu.memory_space<semaphore_mem>>
    %193 = tpu.memref_squeeze %192 : memref<1x1x!tpu.dma_semaphore, #tpu.memory_space<semaphore_mem>> -> memref<!tpu.dma_semaphore, #tpu.memory_space<semaphore_mem>>
    tpu.wait_dma2 semaphore(%193 : memref<!tpu.dma_semaphore, #tpu.memory_space<semaphore_mem>>) src(%189 : memref<1x128xf32, #tpu.memory_space<any>>) dst(%191 : memref<1x128xf32, #tpu.memory_space<vmem>>)
    %c1_i32_191 = arith.constant 1 : i32
    %c1_i32_192 = arith.constant 1 : i32
    %c5_i32_193 = arith.constant 5 : i32
    %c0_i32_194 = arith.constant 0 : i32
    %194 = tpu.memref_slice %arg2[%107, %c0_i32_194] : memref<64x128xf32, #tpu.memory_space<any>> -> memref<1x128xf32, #tpu.memory_space<any>>
    %c5_i32_195 = arith.constant 5 : i32
    %c0_i32_196 = arith.constant 0 : i32
    %195 = tpu.memref_slice %arg5[%c1_i32_191, %c5_i32_195, %c0_i32_196] : memref<2x8x128xf32, #tpu.memory_space<vmem>> -> memref<1x1x128xf32, #tpu.memory_space<vmem>>
    %196 = tpu.memref_squeeze %195 : memref<1x1x128xf32, #tpu.memory_space<vmem>> -> memref<1x128xf32, #tpu.memory_space<vmem>>
    %197 = tpu.memref_slice %arg6[%c1_i32_192, %c5_i32_193] : memref<2x8x!tpu.dma_semaphore, #tpu.memory_space<semaphore_mem>> -> memref<1x1x!tpu.dma_semaphore, #tpu.memory_space<semaphore_mem>>
    %198 = tpu.memref_squeeze %197 : memref<1x1x!tpu.dma_semaphore, #tpu.memory_space<semaphore_mem>> -> memref<!tpu.dma_semaphore, #tpu.memory_space<semaphore_mem>>
    tpu.wait_dma2 semaphore(%198 : memref<!tpu.dma_semaphore, #tpu.memory_space<semaphore_mem>>) src(%194 : memref<1x128xf32, #tpu.memory_space<any>>) dst(%196 : memref<1x128xf32, #tpu.memory_space<vmem>>)
    %c1_i32_197 = arith.constant 1 : i32
    %c1_i32_198 = arith.constant 1 : i32
    %c6_i32_199 = arith.constant 6 : i32
    %c0_i32_200 = arith.constant 0 : i32
    %199 = tpu.memref_slice %arg2[%115, %c0_i32_200] : memref<64x128xf32, #tpu.memory_space<any>> -> memref<1x128xf32, #tpu.memory_space<any>>
    %c6_i32_201 = arith.constant 6 : i32
    %c0_i32_202 = arith.constant 0 : i32
    %200 = tpu.memref_slice %arg5[%c1_i32_197, %c6_i32_201, %c0_i32_202] : memref<2x8x128xf32, #tpu.memory_space<vmem>> -> memref<1x1x128xf32, #tpu.memory_space<vmem>>
    %201 = tpu.memref_squeeze %200 : memref<1x1x128xf32, #tpu.memory_space<vmem>> -> memref<1x128xf32, #tpu.memory_space<vmem>>
    %202 = tpu.memref_slice %arg6[%c1_i32_198, %c6_i32_199] : memref<2x8x!tpu.dma_semaphore, #tpu.memory_space<semaphore_mem>> -> memref<1x1x!tpu.dma_semaphore, #tpu.memory_space<semaphore_mem>>
    %203 = tpu.memref_squeeze %202 : memref<1x1x!tpu.dma_semaphore, #tpu.memory_space<semaphore_mem>> -> memref<!tpu.dma_semaphore, #tpu.memory_space<semaphore_mem>>
    tpu.wait_dma2 semaphore(%203 : memref<!tpu.dma_semaphore, #tpu.memory_space<semaphore_mem>>) src(%199 : memref<1x128xf32, #tpu.memory_space<any>>) dst(%201 : memref<1x128xf32, #tpu.memory_space<vmem>>)
    %c1_i32_203 = arith.constant 1 : i32
    %c1_i32_204 = arith.constant 1 : i32
    %c7_i32_205 = arith.constant 7 : i32
    %c0_i32_206 = arith.constant 0 : i32
    %204 = tpu.memref_slice %arg2[%123, %c0_i32_206] : memref<64x128xf32, #tpu.memory_space<any>> -> memref<1x128xf32, #tpu.memory_space<any>>
    %c7_i32_207 = arith.constant 7 : i32
    %c0_i32_208 = arith.constant 0 : i32
    %205 = tpu.memref_slice %arg5[%c1_i32_203, %c7_i32_207, %c0_i32_208] : memref<2x8x128xf32, #tpu.memory_space<vmem>> -> memref<1x1x128xf32, #tpu.memory_space<vmem>>
    %206 = tpu.memref_squeeze %205 : memref<1x1x128xf32, #tpu.memory_space<vmem>> -> memref<1x128xf32, #tpu.memory_space<vmem>>
    %207 = tpu.memref_slice %arg6[%c1_i32_204, %c7_i32_205] : memref<2x8x!tpu.dma_semaphore, #tpu.memory_space<semaphore_mem>> -> memref<1x1x!tpu.dma_semaphore, #tpu.memory_space<semaphore_mem>>
    %208 = tpu.memref_squeeze %207 : memref<1x1x!tpu.dma_semaphore, #tpu.memory_space<semaphore_mem>> -> memref<!tpu.dma_semaphore, #tpu.memory_space<semaphore_mem>>
    tpu.wait_dma2 semaphore(%208 : memref<!tpu.dma_semaphore, #tpu.memory_space<semaphore_mem>>) src(%204 : memref<1x128xf32, #tpu.memory_space<any>>) dst(%206 : memref<1x128xf32, #tpu.memory_space<vmem>>)
    %c0_209 = arith.constant 0 : index
    %c0_210 = arith.constant 0 : index
    %c0_211 = arith.constant 0 : index
    %209 = vector.load %arg5[%c0_209, %c0_210, %c0_211] : memref<2x8x128xf32, #tpu.memory_space<vmem>>, vector<2x8x128xf32>
    %c0_212 = arith.constant 0 : index
    %c0_213 = arith.constant 0 : index
    %210 = vector.load %arg3[%c0_212, %c0_213] : memref<8x128xf32, #tpu.memory_space<vmem>>, vector<8x128xf32>
    %211 = vector.shape_cast %210 : vector<8x128xf32> to vector<1x8x128xf32>
    %212 = vector.broadcast %211 : vector<1x8x128xf32> to vector<2x8x128xf32>
    %213 = arith.addf %209, %212 : vector<2x8x128xf32>
    %c0_214 = arith.constant 0 : index
    %c0_215 = arith.constant 0 : index
    %c0_216 = arith.constant 0 : index
    %214 = vector.load %arg4[%c0_214, %c0_215, %c0_216] : memref<2x8x128xf32, #tpu.memory_space<vmem>>, vector<2x8x128xf32>
    tpu.vector_store %arg4[%c0_214, %c0_215, %c0_216], %213 {strides = array<i32>} : memref<2x8x128xf32, #tpu.memory_space<vmem>>, vector<2x8x128xf32>,
    return
  }
  func.func @transform_1(%arg0: i32, %arg1: memref<2x8xi32, #tpu.memory_space<smem>>) -> (i32, i32) {
    %c0_i32 = arith.constant 0 : i32
    %c0_i32_0 = arith.constant 0 : i32
    %c0_i32_1 = arith.constant 0 : i32
    return %c0_i32, %c0_i32_0 : i32, i32
  }
  func.func @transform_2(%arg0: i32, %arg1: memref<2x8xi32, #tpu.memory_space<smem>>) -> (i32, i32, i32) {
    %c0_i32 = arith.constant 0 : i32
    %c0_i32_0 = arith.constant 0 : i32
    %c0_i32_1 = arith.constant 0 : i32
    return %arg0, %c0_i32, %c0_i32_0 : i32, i32, i32
  }
}

</mosaic_0001>

<llo_original>
// kernel: tpu_custom_call.1
$region0: #{tpu_custom_call.1}
  #allocation0 [shape = 'u32[]', space=smem, size = 0x4, offset = 0x4, fixed_abs, tag = 'smem constant byte address 0x4 - core index']
  #allocation1 [shape = 'u32[144,128]{1,0:T(1,128)}', space=vmem, size = 0x12000, scoped, tag = 'internal scratch']
  #allocation2 [shape = 'f32[2,8,128]{2,1,0:T(8,128)}', space=vmem, size = 0x2000, scoped, tag = 'scratch operand']
  #allocation3 [shape = 's32[16]{0}', space=sflag, size = 0x40, scoped, tag = 'scratch operand']
  #allocation4 [shape = 's32[1]{0}', space=sflag, size = 0x4, scoped, tag = 'scoped memory for tpu_custom_call.1']
  #allocation5 [shape = 'u8[1024]{0}', space=smem, size = 0x400, scoped, tag = 'prefetched SMEM operand 0']
  #allocation10 [shape = 's32[]', space=sflag, size = 0x4, offset = 0, fixed_abs, tag = 'sflag constant byte address 0x0 - dummy sync flag']
  #allocation11 [shape = 's32[]', space=sflag, size = 0x4, offset = 0, fixed_abs, tag = 'sflag constant byte address 0x0 - dummy sync flag']
  #allocation12 [shape = 'u32[]', space=smem, size = 0x4, offset = 0x44, fixed_abs, tag = 'smem constant byte address 0x44 - assertion arg 0']
  #allocation13 [shape = 'u32[]', space=smem, size = 0x4, offset = 0x48, fixed_abs, tag = 'smem constant byte address 0x48 - assertion arg 1']
  #allocation14 [shape = 's32[]', space=sflag, size = 0x4, offset = 0, fixed_abs, tag = 'sflag constant byte address 0x0 - dummy sync flag']
  #allocation15 [shape = 's32[]', space=sflag, size = 0x4, offset = 0, fixed_abs, tag = 'sflag constant byte address 0x0 - dummy sync flag']
  #allocation16 [shape = 's32[]', space=sflag, size = 0x4, offset = 0, fixed_abs, tag = 'sflag constant byte address 0x0 - dummy sync flag']
  #allocation17 [shape = 's32[]', space=sflag, size = 0x4, offset = 0, fixed_abs, tag = 'sflag constant byte address 0x0 - dummy sync flag']
  #allocation18 [shape = 's32[]', space=sflag, size = 0x4, offset = 0, fixed_abs, tag = 'sflag constant byte address 0x0 - dummy sync flag']
  #allocation19 [shape = 's32[]', space=sflag, size = 0x4, offset = 0, fixed_abs, tag = 'sflag constant byte address 0x0 - dummy sync flag']
  #allocation20 [shape = 's32[]', space=sflag, size = 0x4, offset = 0, fixed_abs, tag = 'sflag constant byte address 0x0 - dummy sync flag']
  #allocation21 [shape = 's32[]', space=sflag, size = 0x4, offset = 0, fixed_abs, tag = 'sflag constant byte address 0x0 - dummy sync flag']
  #allocation22 [shape = 's32[]', space=sflag, size = 0x4, offset = 0, fixed_abs, tag = 'sflag constant byte address 0x0 - dummy sync flag']
  #allocation23 [shape = 's32[]', space=sflag, size = 0x4, offset = 0, fixed_abs, tag = 'sflag constant byte address 0x0 - dummy sync flag']
  #allocation24 [shape = 's32[]', space=sflag, size = 0x4, offset = 0, fixed_abs, tag = 'sflag constant byte address 0x0 - dummy sync flag']
  #allocation25 [shape = 's32[]', space=sflag, size = 0x4, offset = 0, fixed_abs, tag = 'sflag constant byte address 0x0 - dummy sync flag']
  #allocation26 [shape = 's32[]', space=sflag, size = 0x4, offset = 0, fixed_abs, tag = 'sflag constant byte address 0x0 - dummy sync flag']
  #allocation27 [shape = 's32[]', space=sflag, size = 0x4, offset = 0, fixed_abs, tag = 'sflag constant byte address 0x0 - dummy sync flag']
  #allocation28 [shape = 's32[]', space=sflag, size = 0x4, offset = 0, fixed_abs, tag = 'sflag constant byte address 0x0 - dummy sync flag']
  #allocation29 [shape = 's32[]', space=sflag, size = 0x4, offset = 0, fixed_abs, tag = 'sflag constant byte address 0x0 - dummy sync flag']
  #allocation30 [shape = 's32[]', space=sflag, size = 0x4, offset = 0, fixed_abs, tag = 'sflag constant byte address 0x0 - dummy sync flag']
  #allocation31 [shape = 's32[]', space=sflag, size = 0x4, offset = 0, fixed_abs, tag = 'sflag constant byte address 0x0 - dummy sync flag']
  #allocation32 [shape = 's32[]', space=sflag, size = 0x4, offset = 0, fixed_abs, tag = 'sflag constant byte address 0x0 - dummy sync flag']
  #allocation33 [shape = 's32[]', space=sflag, size = 0x4, offset = 0, fixed_abs, tag = 'sflag constant byte address 0x0 - dummy sync flag']
  #allocation34 [shape = 's32[]', space=sflag, size = 0x4, offset = 0, fixed_abs, tag = 'sflag constant byte address 0x0 - dummy sync flag']
  #allocation35 [shape = 's32[]', space=sflag, size = 0x4, offset = 0, fixed_abs, tag = 'sflag constant byte address 0x0 - dummy sync flag']
  #allocation36 [shape = 's32[]', space=sflag, size = 0x4, offset = 0, fixed_abs, tag = 'sflag constant byte address 0x0 - dummy sync flag']
  #allocation37 [shape = 's32[]', space=sflag, size = 0x4, offset = 0, fixed_abs, tag = 'sflag constant byte address 0x0 - dummy sync flag']
  #allocation38 [shape = 's32[]', space=sflag, size = 0x4, offset = 0, fixed_abs, tag = 'sflag constant byte address 0x0 - dummy sync flag']
  #allocation39 [shape = 's32[]', space=sflag, size = 0x4, offset = 0, fixed_abs, tag = 'sflag constant byte address 0x0 - dummy sync flag']
  #allocation40 [shape = 's32[]', space=sflag, size = 0x4, offset = 0, fixed_abs, tag = 'sflag constant byte address 0x0 - dummy sync flag']
  #allocation41 [shape = 's32[]', space=sflag, size = 0x4, offset = 0, fixed_abs, tag = 'sflag constant byte address 0x0 - dummy sync flag']
  #allocation42 [shape = 's32[]', space=sflag, size = 0x4, offset = 0, fixed_abs, tag = 'sflag constant byte address 0x0 - dummy sync flag']
  #allocation43 [shape = 's32[]', space=sflag, size = 0x4, offset = 0, fixed_abs, tag = 'sflag constant byte address 0x0 - dummy sync flag']
  %s0 = inlined_call_operand.hbm [shape: s32[2,8], index: 0, kind: input, shape index: {}]
  %s1 = inlined_call_operand.hbm [shape: f32[64,128], index: 1, kind: input, shape index: {}]
  %s2 = inlined_call_operand.hbm [shape: f32[8,128], index: 2, kind: input, shape index: {}]
  %s3 = inlined_call_operand.hbm [shape: f32[2,8,128], index: 3, kind: output, shape index: {}]
  %s4 = sld [smem:[#allocation0]]
  $region82: #{tpu_custom_call.1} parent=0
    _
  %s6 = ssub.s32 1, %s4
  %s7 = scalar_select 0, %s6, %s4
  %9 = dma.hbm_to_smem %s0, 32, [#allocation5], [#allocation4]
  %10 = dma.done [#allocation4], 32
  %11 = sfence
  $region1: #{tpu_custom_call.1} parent=0
    #allocation6 [shape = 'u8[4096]{0}', space=vmem, size = 0x1000, scoped, tag = 'input window, operand 2, single buffered']
    #allocation7 [shape = 's32[1]{0}', space=sflag, size = 0x4, scoped, tag = 'scoped memory for tpu_custom_call.1']
    #allocation8 [shape = 's32[1]{0}', space=sflag, size = 0x4, scoped, tag = 'scoped memory for tpu_custom_call.1']
    #allocation9 [shape = 'u8[8192]{0}', space=vmem, size = 0x2000, scoped, tag = 'output window, operand 0, single buffered']
    %12 = vsyncpa [#allocation7], 0
    %13 = vsyncpa [#allocation8], 0
    // Predicated region
    $region2: #{tpu_custom_call.1} parent=1 // pred_check
      _
    $region3: #{tpu_custom_call.1} parent=1 // pred_check_branch
      %15 = sbr.rel (0) target = $region5
    $region4: #{tpu_custom_call.1} parent=1 // pred_region
      %s17 = ssub.s32 128, 128
      %18 = vsyncadd [#allocation7], %s17
      %s20 = sshll.u32 [#allocation6], 4
      %s21 = int_to_ptr.vmem [resolvable:$true] %s20
      %23 = dma.hbm_to_vmem [thread:$0]  %s2, 128, %s21, [#allocation7]
    $region5: #{tpu_custom_call.1} parent=1 // pred_fallthru
      _
    // Predicated region
    $region6: #{tpu_custom_call.1} parent=1 // pred_check
      _
    $region7: #{tpu_custom_call.1} parent=1 // pred_check_branch
      %25 = sbr.rel (0) target = $region9
    $region8: #{tpu_custom_call.1} parent=1 // pred_region
      %26 = dma.done [#allocation7], 128
    $region9: #{tpu_custom_call.1} parent=1 // pred_fallthru
      _
    %s27 = smul.u32 0, 2
    %s28 = smul.u32 %s27, 128
    %s29 = sld [smem:[#allocation5 + %s28]]
    %s30 = smul.addr %s29, 16
    %s31 = scalar_lea.hbm %s1, %s30
    // Predicated region
    $region10: #{tpu_custom_call.1} parent=1 // pred_check
      _
    $region11: #{tpu_custom_call.1} parent=1 // pred_check_branch
      %33 = sbr.rel target = $region13
    $region12: #{tpu_custom_call.1} parent=1 // pred_region
      %34 = sst [smem:[#allocation12]] [#allocation11]
      %35 = sst [smem:[#allocation13]] [#allocation10]
    $region13: #{tpu_custom_call.1} parent=1 // pred_fallthru
      _
    %37 = shalt.err (0)
    %s39 = sshll.u32 [#allocation2], 4
    %s40 = int_to_ptr.vmem [resolvable:$true] %s39
    %42 = dma.hbm_to_vmem [thread:$0]  %s31, 16, %s40, [#allocation3]
    %s43 = sadd.s32 %s28, 1
    %s44 = sld [smem:[#allocation5 + %s43]]
    %s45 = smul.addr %s44, 16
    %s46 = scalar_lea.hbm %s1, %s45
    %s47 = scalar_lea.vmem [#allocation2], 1
    %s48 = scalar_lea.sflag [#allocation3], 1
    // Predicated region
    $region14: #{tpu_custom_call.1} parent=1 // pred_check
      _
    $region15: #{tpu_custom_call.1} parent=1 // pred_check_branch
      %50 = sbr.rel target = $region17
    $region16: #{tpu_custom_call.1} parent=1 // pred_region
      %51 = sst [smem:[#allocation12]] [#allocation15]
      %52 = sst [smem:[#allocation13]] [#allocation14]
    $region17: #{tpu_custom_call.1} parent=1 // pred_fallthru
      _
    %54 = shalt.err (0)
    %s56 = sshll.u32 %s47, 4
    %s57 = int_to_ptr.vmem [resolvable:$true] %s56
    %59 = dma.hbm_to_vmem [thread:$0]  %s46, 16, %s57, %s48
    %s60 = sadd.s32 %s28, 2
    %s61 = sld [smem:[#allocation5 + %s60]]
    %s62 = smul.addr %s61, 16
    %s63 = scalar_lea.hbm %s1, %s62
    %s64 = scalar_lea.vmem [#allocation2], 2
    %s65 = scalar_lea.sflag [#allocation3], 2
    // Predicated region
    $region18: #{tpu_custom_call.1} parent=1 // pred_check
      _
    $region19: #{tpu_custom_call.1} parent=1 // pred_check_branch
      %67 = sbr.rel target = $region21
    $region20: #{tpu_custom_call.1} parent=1 // pred_region
      %68 = sst [smem:[#allocation12]] [#allocation17]
      %69 = sst [smem:[#allocation13]] [#allocation16]
    $region21: #{tpu_custom_call.1} parent=1 // pred_fallthru
      _
    %71 = shalt.err (0)
    %s73 = sshll.u32 %s64, 4
    %s74 = int_to_ptr.vmem [resolvable:$true] %s73
    %76 = dma.hbm_to_vmem [thread:$0]  %s63, 16, %s74, %s65
    %s77 = sadd.s32 %s28, 3
    %s78 = sld [smem:[#allocation5 + %s77]]
    %s79 = smul.addr %s78, 16
    %s80 = scalar_lea.hbm %s1, %s79
    %s81 = scalar_lea.vmem [#allocation2], 3
    %s82 = scalar_lea.sflag [#allocation3], 3
    // Predicated region
    $region22: #{tpu_custom_call.1} parent=1 // pred_check
      _
    $region23: #{tpu_custom_call.1} parent=1 // pred_check_branch
      %84 = sbr.rel target = $region25
    $region24: #{tpu_custom_call.1} parent=1 // pred_region
      %85 = sst [smem:[#allocation12]] [#allocation19]
      %86 = sst [smem:[#allocation13]] [#allocation18]
    $region25: #{tpu_custom_call.1} parent=1 // pred_fallthru
      _
    %88 = shalt.err (0)
    %s90 = sshll.u32 %s81, 4
    %s91 = int_to_ptr.vmem [resolvable:$true] %s90
    %93 = dma.hbm_to_vmem [thread:$0]  %s80, 16, %s91, %s82
    %s94 = sadd.s32 %s28, 4
    %s95 = sld [smem:[#allocation5 + %s94]]
    %s96 = smul.addr %s95, 16
    %s97 = scalar_lea.hbm %s1, %s96
    %s98 = scalar_lea.vmem [#allocation2], 4
    %s99 = scalar_lea.sflag [#allocation3], 4
    // Predicated region
    $region26: #{tpu_custom_call.1} parent=1 // pred_check
      _
    $region27: #{tpu_custom_call.1} parent=1 // pred_check_branch
      %101 = sbr.rel target = $region29
    $region28: #{tpu_custom_call.1} parent=1 // pred_region
      %102 = sst [smem:[#allocation12]] [#allocation21]
      %103 = sst [smem:[#allocation13]] [#allocation20]
    $region29: #{tpu_custom_call.1} parent=1 // pred_fallthru
      _
    %105 = shalt.err (0)
    %s107 = sshll.u32 %s98, 4
    %s108 = int_to_ptr.vmem [resolvable:$true] %s107
    %110 = dma.hbm_to_vmem [thread:$0]  %s97, 16, %s108, %s99
    %s111 = sadd.s32 %s28, 5
    %s112 = sld [smem:[#allocation5 + %s111]]
    %s113 = smul.addr %s112, 16
    %s114 = scalar_lea.hbm %s1, %s113
    %s115 = scalar_lea.vmem [#allocation2], 5
    %s116 = scalar_lea.sflag [#allocation3], 5
    // Predicated region
    $region30: #{tpu_custom_call.1} parent=1 // pred_check
      _
    $region31: #{tpu_custom_call.1} parent=1 // pred_check_branch
      %118 = sbr.rel target = $region33
    $region32: #{tpu_custom_call.1} parent=1 // pred_region
      %119 = sst [smem:[#allocation12]] [#allocation23]
      %120 = sst [smem:[#allocation13]] [#allocation22]
    $region33: #{tpu_custom_call.1} parent=1 // pred_fallthru
      _
    %122 = shalt.err (0)
    %s124 = sshll.u32 %s115, 4
    %s125 = int_to_ptr.vmem [resolvable:$true] %s124
    %127 = dma.hbm_to_vmem [thread:$0]  %s114, 16, %s125, %s116
    %s128 = sadd.s32 %s28, 6
    %s129 = sld [smem:[#allocation5 + %s128]]
    %s130 = smul.addr %s129, 16
    %s131 = scalar_lea.hbm %s1, %s130
    %s132 = scalar_lea.vmem [#allocation2], 6
    %s133 = scalar_lea.sflag [#allocation3], 6
    // Predicated region
    $region34: #{tpu_custom_call.1} parent=1 // pred_check
      _
    $region35: #{tpu_custom_call.1} parent=1 // pred_check_branch
      %135 = sbr.rel target = $region37
    $region36: #{tpu_custom_call.1} parent=1 // pred_region
      %136 = sst [smem:[#allocation12]] [#allocation25]
      %137 = sst [smem:[#allocation13]] [#allocation24]
    $region37: #{tpu_custom_call.1} parent=1 // pred_fallthru
      _
    %139 = shalt.err (0)
    %s141 = sshll.u32 %s132, 4
    %s142 = int_to_ptr.vmem [resolvable:$true] %s141
    %144 = dma.hbm_to_vmem [thread:$0]  %s131, 16, %s142, %s133
    %s145 = sadd.s32 %s28, 7
    %s146 = sld [smem:[#allocation5 + %s145]]
    %s147 = smul.addr %s146, 16
    %s148 = scalar_lea.hbm %s1, %s147
    %s149 = scalar_lea.vmem [#allocation2], 7
    %s150 = scalar_lea.sflag [#allocation3], 7
    // Predicated region
    $region38: #{tpu_custom_call.1} parent=1 // pred_check
      _
    $region39: #{tpu_custom_call.1} parent=1 // pred_check_branch
      %152 = sbr.rel target = $region41
    $region40: #{tpu_custom_call.1} parent=1 // pred_region
      %153 = sst [smem:[#allocation12]] [#allocation27]
      %154 = sst [smem:[#allocation13]] [#allocation26]
    $region41: #{tpu_custom_call.1} parent=1 // pred_fallthru
      _
    %156 = shalt.err (0)
    %s158 = sshll.u32 %s149, 4
    %s159 = int_to_ptr.vmem [resolvable:$true] %s158
    %161 = dma.hbm_to_vmem [thread:$0]  %s148, 16, %s159, %s150
    %s162 = sadd.s32 %s27, 1
    %s163 = smul.u32 %s162, 128
    %s164 = sld [smem:[#allocation5 + %s163]]
    %s165 = smul.addr %s164, 16
    %s166 = scalar_lea.hbm %s1, %s165
    %s167 = scalar_lea.vmem [#allocation2], 8
    %s168 = scalar_lea.sflag [#allocation3], 8
    // Predicated region
    $region42: #{tpu_custom_call.1} parent=1 // pred_check
      _
    $region43: #{tpu_custom_call.1} parent=1 // pred_check_branch
      %170 = sbr.rel target = $region45
    $region44: #{tpu_custom_call.1} parent=1 // pred_region
      %171 = sst [smem:[#allocation12]] [#allocation29]
      %172 = sst [smem:[#allocation13]] [#allocation28]
    $region45: #{tpu_custom_call.1} parent=1 // pred_fallthru
      _
    %174 = shalt.err (0)
    %s176 = sshll.u32 %s167, 4
    %s177 = int_to_ptr.vmem [resolvable:$true] %s176
    %179 = dma.hbm_to_vmem [thread:$0]  %s166, 16, %s177, %s168
    %s180 = sadd.s32 %s163, 1
    %s181 = sld [smem:[#allocation5 + %s180]]
    %s182 = smul.addr %s181, 16
    %s183 = scalar_lea.hbm %s1, %s182
    %s184 = scalar_lea.vmem [#allocation2], 9
    %s185 = scalar_lea.sflag [#allocation3], 9
    // Predicated region
    $region46: #{tpu_custom_call.1} parent=1 // pred_check
      _
    $region47: #{tpu_custom_call.1} parent=1 // pred_check_branch
      %187 = sbr.rel target = $region49
    $region48: #{tpu_custom_call.1} parent=1 // pred_region
      %188 = sst [smem:[#allocation12]] [#allocation31]
      %189 = sst [smem:[#allocation13]] [#allocation30]
    $region49: #{tpu_custom_call.1} parent=1 // pred_fallthru
      _
    %191 = shalt.err (0)
    %s193 = sshll.u32 %s184, 4
    %s194 = int_to_ptr.vmem [resolvable:$true] %s193
    %196 = dma.hbm_to_vmem [thread:$0]  %s183, 16, %s194, %s185
    %s197 = sadd.s32 %s163, 2
    %s198 = sld [smem:[#allocation5 + %s197]]
    %s199 = smul.addr %s198, 16
    %s200 = scalar_lea.hbm %s1, %s199
    %s201 = scalar_lea.vmem [#allocation2], 10
    %s202 = scalar_lea.sflag [#allocation3], 10
    // Predicated region
    $region50: #{tpu_custom_call.1} parent=1 // pred_check
      _
    $region51: #{tpu_custom_call.1} parent=1 // pred_check_branch
      %204 = sbr.rel target = $region53
    $region52: #{tpu_custom_call.1} parent=1 // pred_region
      %205 = sst [smem:[#allocation12]] [#allocation33]
      %206 = sst [smem:[#allocation13]] [#allocation32]
    $region53: #{tpu_custom_call.1} parent=1 // pred_fallthru
      _
    %208 = shalt.err (0)
    %s210 = sshll.u32 %s201, 4
    %s211 = int_to_ptr.vmem [resolvable:$true] %s210
    %213 = dma.hbm_to_vmem [thread:$0]  %s200, 16, %s211, %s202
    %s214 = sadd.s32 %s163, 3
    %s215 = sld [smem:[#allocation5 + %s214]]
    %s216 = smul.addr %s215, 16
    %s217 = scalar_lea.hbm %s1, %s216
    %s218 = scalar_lea.vmem [#allocation2], 11
    %s219 = scalar_lea.sflag [#allocation3], 11
    // Predicated region
    $region54: #{tpu_custom_call.1} parent=1 // pred_check
      _
    $region55: #{tpu_custom_call.1} parent=1 // pred_check_branch
      %221 = sbr.rel target = $region57
    $region56: #{tpu_custom_call.1} parent=1 // pred_region
      %222 = sst [smem:[#allocation12]] [#allocation35]
      %223 = sst [smem:[#allocation13]] [#allocation34]
    $region57: #{tpu_custom_call.1} parent=1 // pred_fallthru
      _
    %225 = shalt.err (0)
    %s227 = sshll.u32 %s218, 4
    %s228 = int_to_ptr.vmem [resolvable:$true] %s227
    %230 = dma.hbm_to_vmem [thread:$0]  %s217, 16, %s228, %s219
    %s231 = sadd.s32 %s163, 4
    %s232 = sld [smem:[#allocation5 + %s231]]
    %s233 = smul.addr %s232, 16
    %s234 = scalar_lea.hbm %s1, %s233
    %s235 = scalar_lea.vmem [#allocation2], 12
    %s236 = scalar_lea.sflag [#allocation3], 12
    // Predicated region
    $region58: #{tpu_custom_call.1} parent=1 // pred_check
      _
    $region59: #{tpu_custom_call.1} parent=1 // pred_check_branch
      %238 = sbr.rel target = $region61
    $region60: #{tpu_custom_call.1} parent=1 // pred_region
      %239 = sst [smem:[#allocation12]] [#allocation37]
      %240 = sst [smem:[#allocation13]] [#allocation36]
    $region61: #{tpu_custom_call.1} parent=1 // pred_fallthru
      _
    %242 = shalt.err (0)
    %s244 = sshll.u32 %s235, 4
    %s245 = int_to_ptr.vmem [resolvable:$true] %s244
    %247 = dma.hbm_to_vmem [thread:$0]  %s234, 16, %s245, %s236
    %s248 = sadd.s32 %s163, 5
    %s249 = sld [smem:[#allocation5 + %s248]]
    %s250 = smul.addr %s249, 16
    %s251 = scalar_lea.hbm %s1, %s250
    %s252 = scalar_lea.vmem [#allocation2], 13
    %s253 = scalar_lea.sflag [#allocation3], 13
    // Predicated region
    $region62: #{tpu_custom_call.1} parent=1 // pred_check
      _
    $region63: #{tpu_custom_call.1} parent=1 // pred_check_branch
      %255 = sbr.rel target = $region65
    $region64: #{tpu_custom_call.1} parent=1 // pred_region
      %256 = sst [smem:[#allocation12]] [#allocation39]
      %257 = sst [smem:[#allocation13]] [#allocation38]
    $region65: #{tpu_custom_call.1} parent=1 // pred_fallthru
      _
    %259 = shalt.err (0)
    %s261 = sshll.u32 %s252, 4
    %s262 = int_to_ptr.vmem [resolvable:$true] %s261
    %264 = dma.hbm_to_vmem [thread:$0]  %s251, 16, %s262, %s253
    %s265 = sadd.s32 %s163, 6
    %s266 = sld [smem:[#allocation5 + %s265]]
    %s267 = smul.addr %s266, 16
    %s268 = scalar_lea.hbm %s1, %s267
    %s269 = scalar_lea.vmem [#allocation2], 14
    %s270 = scalar_lea.sflag [#allocation3], 14
    // Predicated region
    $region66: #{tpu_custom_call.1} parent=1 // pred_check
      _
    $region67: #{tpu_custom_call.1} parent=1 // pred_check_branch
      %272 = sbr.rel target = $region69
    $region68: #{tpu_custom_call.1} parent=1 // pred_region
      %273 = sst [smem:[#allocation12]] [#allocation41]
      %274 = sst [smem:[#allocation13]] [#allocation40]
    $region69: #{tpu_custom_call.1} parent=1 // pred_fallthru
      _
    %276 = shalt.err (0)
    %s278 = sshll.u32 %s269, 4
    %s279 = int_to_ptr.vmem [resolvable:$true] %s278
    %281 = dma.hbm_to_vmem [thread:$0]  %s268, 16, %s279, %s270
    %s282 = sadd.s32 %s163, 7
    %s283 = sld [smem:[#allocation5 + %s282]]
    %s284 = smul.addr %s283, 16
    %s285 = scalar_lea.hbm %s1, %s284
    %s286 = scalar_lea.vmem [#allocation2], 15
    %s287 = scalar_lea.sflag [#allocation3], 15
    // Predicated region
    $region70: #{tpu_custom_call.1} parent=1 // pred_check
      _
    $region71: #{tpu_custom_call.1} parent=1 // pred_check_branch
      %289 = sbr.rel target = $region73
    $region72: #{tpu_custom_call.1} parent=1 // pred_region
      %290 = sst [smem:[#allocation12]] [#allocation43]
      %291 = sst [smem:[#allocation13]] [#allocation42]
    $region73: #{tpu_custom_call.1} parent=1 // pred_fallthru
      _
    %293 = shalt.err (0)
    %s295 = sshll.u32 %s286, 4
    %s296 = int_to_ptr.vmem [resolvable:$true] %s295
    %298 = dma.hbm_to_vmem [thread:$0]  %s285, 16, %s296, %s287
    %s299 = smul.u32 1, 1
    %s300 = sshll.u32 %s299, 4
    %301 = dma.done [#allocation3], %s300
    %s302 = sshll.u32 %s299, 4
    %303 = dma.done %s48, %s302
    %s304 = sshll.u32 %s299, 4
    %305 = dma.done %s65, %s304
    %s306 = sshll.u32 %s299, 4
    %307 = dma.done %s82, %s306
    %s308 = sshll.u32 %s299, 4
    %309 = dma.done %s99, %s308
    %s310 = sshll.u32 %s299, 4
    %311 = dma.done %s116, %s310
    %s312 = sshll.u32 %s299, 4
    %313 = dma.done %s133, %s312
    %s314 = sshll.u32 %s299, 4
    %315 = dma.done %s150, %s314
    %s316 = sshll.u32 %s299, 4
    %317 = dma.done %s168, %s316
    %s318 = sshll.u32 %s299, 4
    %319 = dma.done %s185, %s318
    %s320 = sshll.u32 %s299, 4
    %321 = dma.done %s202, %s320
    %s322 = sshll.u32 %s299, 4
    %323 = dma.done %s219, %s322
    %s324 = sshll.u32 %s299, 4
    %325 = dma.done %s236, %s324
    %s326 = sshll.u32 %s299, 4
    %327 = dma.done %s253, %s326
    %s328 = sshll.u32 %s299, 4
    %329 = dma.done %s270, %s328
    %s330 = sshll.u32 %s299, 4
    %331 = dma.done %s287, %s330
    %v332 = vld [vmem:[#allocation2] sm:$0xff]
    %v333 = vld [vmem:[#allocation2 + $0x8] sm:$0xff]
    %v334 = vld [vmem:[#allocation6] sm:$0xff]
    %v335 = vadd.f32 %v332, %v334
    %v336 = vadd.f32 %v333, %v334
    %337 = vst [vmem:[#allocation9] sm:$0xff] %v335
    %338 = vst [vmem:[#allocation9 + $0x8] sm:$0xff] %v336
    // Predicated region
    $region74: #{tpu_custom_call.1} parent=1 // pred_check
      _
    $region75: #{tpu_custom_call.1} parent=1 // pred_check_branch
      %340 = sbr.rel (0) target = $region77
    $region76: #{tpu_custom_call.1} parent=1 // pred_region
      %s342 = ssub.s32 256, 256
      %343 = vsyncadd [#allocation8], %s342
      %s344 = sshll.u32 [#allocation9], 4
      %s345 = int_to_ptr.vmem [resolvable:$true] %s344
      %350 = dma.vmem_to_hbm [thread:$0]  %s345, 256, %s3, [#allocation8], 128, 128, 8
    $region77: #{tpu_custom_call.1} parent=1 // pred_fallthru
      _
    // Predicated region
    $region78: #{tpu_custom_call.1} parent=1 // pred_check
      _
    $region79: #{tpu_custom_call.1} parent=1 // pred_check_branch
      %352 = sbr.rel (0) target = $region81
    $region80: #{tpu_custom_call.1} parent=1 // pred_region
      %353 = dma.done [#allocation8], 256
    $region81: #{tpu_custom_call.1} parent=1 // pred_fallthru
      _
    %354 = vsyncpa [#allocation7], 1
    %355 = vsyncpa [#allocation8], 1
  %356 = vsyncmov [#allocation3]
  %s357 = vpop.sfrf %356
  %p358 = scmp.eq.s32.totalorder %s357, 0
  %p359 = pneg %p358
  %361 = shalt.err (%p359)
  %s362 = scalar_lea.sflag [#allocation3], 1
  %363 = vsyncmov %s362
  %s364 = vpop.sfrf %363
  %p365 = scmp.eq.s32.totalorder %s364, 0
  %p366 = pneg %p365
  %368 = shalt.err (%p366)
  %s369 = scalar_lea.sflag [#allocation3], 2
  %370 = vsyncmov %s369
  %s371 = vpop.sfrf %370
  %p372 = scmp.eq.s32.totalorder %s371, 0
  %p373 = pneg %p372
  %375 = shalt.err (%p373)
  %s376 = scalar_lea.sflag [#allocation3], 3
  %377 = vsyncmov %s376
  %s378 = vpop.sfrf %377
  %p379 = scmp.eq.s32.totalorder %s378, 0
  %p380 = pneg %p379
  %382 = shalt.err (%p380)
  %s383 = scalar_lea.sflag [#allocation3], 4
  %384 = vsyncmov %s383
  %s385 = vpop.sfrf %384
  %p386 = scmp.eq.s32.totalorder %s385, 0
  %p387 = pneg %p386
  %389 = shalt.err (%p387)
  %s390 = scalar_lea.sflag [#allocation3], 5
  %391 = vsyncmov %s390
  %s392 = vpop.sfrf %391
  %p393 = scmp.eq.s32.totalorder %s392, 0
  %p394 = pneg %p393
  %396 = shalt.err (%p394)
  %s397 = scalar_lea.sflag [#allocation3], 6
  %398 = vsyncmov %s397
  %s399 = vpop.sfrf %398
  %p400 = scmp.eq.s32.totalorder %s399, 0
  %p401 = pneg %p400
  %403 = shalt.err (%p401)
  %s404 = scalar_lea.sflag [#allocation3], 7
  %405 = vsyncmov %s404
  %s406 = vpop.sfrf %405
  %p407 = scmp.eq.s32.totalorder %s406, 0
  %p408 = pneg %p407
  %410 = shalt.err (%p408)
  %s411 = scalar_lea.sflag [#allocation3], 8
  %412 = vsyncmov %s411
  %s413 = vpop.sfrf %412
  %p414 = scmp.eq.s32.totalorder %s413, 0
  %p415 = pneg %p414
  %417 = shalt.err (%p415)
  %s418 = scalar_lea.sflag [#allocation3], 9
  %419 = vsyncmov %s418
  %s420 = vpop.sfrf %419
  %p421 = scmp.eq.s32.totalorder %s420, 0
  %p422 = pneg %p421
  %424 = shalt.err (%p422)
  %s425 = scalar_lea.sflag [#allocation3], 10
  %426 = vsyncmov %s425
  %s427 = vpop.sfrf %426
  %p428 = scmp.eq.s32.totalorder %s427, 0
  %p429 = pneg %p428
  %431 = shalt.err (%p429)
  %s432 = scalar_lea.sflag [#allocation3], 11
  %433 = vsyncmov %s432
  %s434 = vpop.sfrf %433
  %p435 = scmp.eq.s32.totalorder %s434, 0
  %p436 = pneg %p435
  %438 = shalt.err (%p436)
  %s439 = scalar_lea.sflag [#allocation3], 12
  %440 = vsyncmov %s439
  %s441 = vpop.sfrf %440
  %p442 = scmp.eq.s32.totalorder %s441, 0
  %p443 = pneg %p442
  %445 = shalt.err (%p443)
  %s446 = scalar_lea.sflag [#allocation3], 13
  %447 = vsyncmov %s446
  %s448 = vpop.sfrf %447
  %p449 = scmp.eq.s32.totalorder %s448, 0
  %p450 = pneg %p449
  %452 = shalt.err (%p450)
  %s453 = scalar_lea.sflag [#allocation3], 14
  %454 = vsyncmov %s453
  %s455 = vpop.sfrf %454
  %p456 = scmp.eq.s32.totalorder %s455, 0
  %p457 = pneg %p456
  %459 = shalt.err (%p457)
  %s460 = scalar_lea.sflag [#allocation3], 15
  %461 = vsyncmov %s460
  %s462 = vpop.sfrf %461
  %p463 = scmp.eq.s32.totalorder %s462, 0
  %p464 = pneg %p463
  %466 = shalt.err (%p464)

</llo_original>
